<compile_context>
chip_gen: v7x
topology: tpu7x:2x2x1
jax: 0.10.0
libtpu: 0.0.40
codegen_flags: <defaults>
</compile_context>

<pallas_src>
import functools

import jax
import jax.numpy as jnp
from jax.experimental import pallas as pl
from jax.experimental.pallas import tpu as pltpu


# ----------------------------------------------------------------------------
# Kernel
# ----------------------------------------------------------------------------
def _lstm_layer_kernel(x_ref, w_ih_ref, w_hh_ref, b_ref,
                       ht_ref, h_out_ref, c_out_ref,
                       xw_scr, h_scr, c_scr,
                       *, t_blk, b_tile):
    """One LSTM layer; one time *block* (t_blk steps) per grid iteration.

    Grid: (batch_tiles [parallel], S // t_blk [arbitrary, sequential]).

    x_ref   : (t_blk*b_tile, I)  bf16  time-major-flattened inputs, this block
    w_ih_ref: (I, 4H)            bf16  input->gates weight (pre-transposed)
    w_hh_ref: (H, 4H)            bf16  hidden->gates weight (pre-transposed)
    b_ref   : (1, 4H)            f32   combined bias (b_ih + b_hh)
    ht_ref  : (t_blk*b_tile, H)  bf16  per-step hidden outputs for this block
    h_out_ref, c_out_ref : (b_tile, H) f32  final h / c (resident accumulators)
    xw_scr  : (t_blk*b_tile, 4H) f32   staged input-GEMM results
    h_scr, c_scr : (b_tile, H)   f32   recurrent state
    """
    tb = pl.program_id(1)

    @pl.when(tb == 0)
    def _():
        h_scr[...] = jnp.zeros_like(h_scr)
        c_scr[...] = jnp.zeros_like(c_scr)

    # Hoisted (non-recurrent) input GEMM for the whole time block: one
    # (t_blk*b_tile, I) @ (I, 4H) bf16 matmul, f32 accumulate, f32 bias add.
    # Gate order: i, f, g, o.
    xw_scr[...] = (
        jnp.dot(x_ref[...], w_ih_ref[...], preferred_element_type=jnp.float32)
        + b_ref[...])

    H = h_scr.shape[1]
    w_hh = w_hh_ref[...]          # bf16; loaded once, reused by every step

    def cell(gates, c):
        # All gate / state math stays f32 (v5e-friendly; not the binding slot).
        i_g = jax.nn.sigmoid(gates[:, 0 * H:1 * H])
        f_g = jax.nn.sigmoid(gates[:, 1 * H:2 * H])
        g_g = jnp.tanh(gates[:, 2 * H:3 * H])
        o_g = jax.nn.sigmoid(gates[:, 3 * H:4 * H])
        c_new = f_g * c + i_g * g_g
        h_new = o_g * jnp.tanh(c_new)
        return h_new, c_new

    dual = (b_tile >= 16) and (b_tile % 16 == 0)
    half = b_tile // 2

    # Fully unrolled recurrence; every slice start below is a static multiple
    # of 8 sublanes -> aligned views / unmasked stores.
    for i in range(t_blk):
        row = i * b_tile
        if dual:
            # Two independent batch sub-streams: two matmul->EUP->VPU chains
            # with no data dependence, so the scheduler can interleave them.
            for off in (0, half):
                h = h_scr[pl.ds(off, half), :]
                c = c_scr[pl.ds(off, half), :]
                gates = xw_scr[pl.ds(row + off, half), :] + jnp.dot(
                    h.astype(jnp.bfloat16), w_hh,
                    preferred_element_type=jnp.float32)
                h_new, c_new = cell(gates, c)
                h_scr[pl.ds(off, half), :] = h_new
                c_scr[pl.ds(off, half), :] = c_new
                ht_ref[pl.ds(row + off, half), :] = h_new.astype(ht_ref.dtype)
        else:
            h = h_scr[...]
            c = c_scr[...]
            gates = xw_scr[pl.ds(row, b_tile), :] + jnp.dot(
                h.astype(jnp.bfloat16), w_hh,
                preferred_element_type=jnp.float32)
            h_new, c_new = cell(gates, c)
            h_scr[...] = h_new
            c_scr[...] = c_new
            ht_ref[pl.ds(row, b_tile), :] = h_new.astype(ht_ref.dtype)

    # Final-state stores only on the last time block (not every step).
    @pl.when(tb == pl.num_programs(1) - 1)
    def _():
        h_out_ref[...] = h_scr[...]
        c_out_ref[...] = c_scr[...]


# ----------------------------------------------------------------------------
# pallas_call wrapper (one layer)
# ----------------------------------------------------------------------------
@functools.lru_cache(maxsize=1)
def _vmem_limit_bytes():
    """Generation-aware scoped-VMEM limit (~80% of physical)."""
    try:
        cap = pltpu.get_tpu_info().vmem_capacity_bytes
        return int(cap * 0.8)          # ~102 MiB on v5e/v6e, ~51 MiB on v7x
    except Exception:
        return 48 * 1024 * 1024        # conservative fallback, fits all gens


def _resident_spec(shape):
    """BlockSpec for grid-invariant operands (weights / bias).

    Single-buffered (Buffered(1)) when supported: the index_map is constant,
    so double-buffering would only duplicate the weights in VMEM.
    """
    index_map = lambda bt, tb: (0,) * len(shape)
    if hasattr(pl, "Buffered"):
        try:
            return pl.BlockSpec(shape, index_map, pipeline_mode=pl.Buffered(1))
        except TypeError:              # older jax without pipeline_mode kwarg
            pass
    return pl.BlockSpec(shape, index_map)


def _run_lstm_layer(x_f, w_ih_t, w_hh_t, b, *, seq_len, b_tile, t_blk):
    """x_f: (NB, seq_len*b_tile, I) bf16 per-batch-tile time-major rows.

    Returns (ht (NB, seq_len*b_tile, H) bf16,
             h_final (NB, b_tile, H) f32, c_final (NB, b_tile, H) f32).
    """
    NB, SB, I = x_f.shape
    H4 = w_ih_t.shape[1]
    H = w_hh_t.shape[0]
    NT = seq_len // t_blk
    rows = t_blk * b_tile

    kernel = functools.partial(_lstm_layer_kernel, t_blk=t_blk, b_tile=b_tile)

    grid_spec = pltpu.PrefetchScalarGridSpec(
        num_scalar_prefetch=0,
        grid=(NB, NT),
        in_specs=[
            pl.BlockSpec((None, rows, I), lambda bt, tb: (bt, tb, 0)),  # x blk
            _resident_spec((I, H4)),                                    # W_ih^T
            _resident_spec((H, H4)),                                    # W_hh^T
            _resident_spec((1, H4)),                                    # bias
        ],
        out_specs=[
            pl.BlockSpec((None, rows, H), lambda bt, tb: (bt, tb, 0)),   # ht
            pl.BlockSpec((None, b_tile, H), lambda bt, tb: (bt, 0, 0)),  # h_f
            pl.BlockSpec((None, b_tile, H), lambda bt, tb: (bt, 0, 0)),  # c_f
        ],
        scratch_shapes=[
            # TODO(synk): at production H on v7x, cap t_blk or stage xw in
            # bf16 to keep this slab inside the 64 MiB VMEM budget.
            pltpu.VMEM((rows, H4), jnp.float32),    # staged input-GEMM results
            pltpu.VMEM((b_tile, H), jnp.float32),   # h state
            pltpu.VMEM((b_tile, H), jnp.float32),   # c state
        ],
    )

    out_shapes = (
        jax.ShapeDtypeStruct((NB, SB, H), jnp.bfloat16),   # inter-layer slab
        jax.ShapeDtypeStruct((NB, b_tile, H), jnp.float32),
        jax.ShapeDtypeStruct((NB, b_tile, H), jnp.float32),
    )

    return pl.pallas_call(
        kernel,
        out_shape=out_shapes,
        grid_spec=grid_spec,
        compiler_params=pltpu.CompilerParams(
            # Batch tiles are independent (megacore on v7x); the time-block
            # axis carries the recurrence and must stay sequential.
            dimension_semantics=("parallel", "arbitrary"),
            vmem_limit_bytes=_vmem_limit_bytes(),
        ),
    )(x_f, w_ih_t, w_hh_t, b)


# ----------------------------------------------------------------------------
# Full model forward
# ----------------------------------------------------------------------------
@functools.partial(jax.jit, static_argnames=("t_blk", "b_tile"))
def lstm_model_forward(X, params, *, t_blk=8, b_tile=None):
    """Reproduces LSTMModel.forward (eval mode; dropout_i = dropout_h = 0).

    X: (batch, seq, input_size) f32
    params: tuple of per-layer (W_ih^T (I_l,4H), W_hh^T (H,4H), bias (1,4H)) f32
    Returns (ht (B,S,H) f32, (all_h (L,B,H) f32, all_c (L,B,H) f32))
    """
    B, S, I = X.shape
    L = len(params)
    H = params[0][1].shape[0]

    # Static tiling.  b_tile must be a sublane multiple (8).  On v7x pass
    # b_tile <= B//2 so both TensorCores get a batch tile; on v5e/v6e the
    # default (single tile, b_tile = padded B) maximizes MXU row fill.
    if b_tile is None:
        b_tile = max(8, ((B + 7) // 8) * 8)
    assert b_tile % 8 == 0
    B_pad = ((B + b_tile - 1) // b_tile) * b_tile
    NB = B_pad // b_tile

    t_blk = max(1, min(t_blk, S))
    while S % t_blk:
        t_blk -= 1

    if B_pad != B:
        X = jnp.pad(X, ((0, B_pad - B), (0, 0), (0, 0)))

    # (B,S,I) -> time-major (S,B,I) -> per-batch-tile, time-major-flattened
    # rows (NB, S*b_tile, I): row r = t*b_tile + (batch index within tile).
    # Cast to bf16 once: MXU operand dtype and halved HBM traffic.
    x = (jnp.transpose(X, (1, 0, 2))
         .reshape(S, NB, b_tile, I)
         .transpose(1, 0, 2, 3)
         .reshape(NB, S * b_tile, I)
         .astype(jnp.bfloat16))

    all_h, all_c = [], []
    for (w_ih_t, w_hh_t, bias) in params:
        x, h_f, c_f = _run_lstm_layer(
            x,
            w_ih_t.astype(jnp.bfloat16),
            w_hh_t.astype(jnp.bfloat16),
            bias.astype(jnp.float32),
            seq_len=S, b_tile=b_tile, t_blk=t_blk)
        all_h.append(h_f)
        all_c.append(c_f)

    # Only the user-facing output is cast back to f32.
    ht = (x.astype(jnp.float32)
          .reshape(NB, S, b_tile, H)
          .transpose(1, 0, 2, 3)
          .reshape(S, B_pad, H)
          .transpose(1, 0, 2))[:B]                       # (B, S, H)
    all_h = jnp.stack(all_h, axis=0).reshape(L, B_pad, H)[:, :B]
    all_c = jnp.stack(all_c, axis=0).reshape(L, B_pad, H)[:, :B]
    return ht, (all_h, all_c)


# ----------------------------------------------------------------------------
# Pure-JAX reference & params
# ----------------------------------------------------------------------------
def _reference_forward(X, params):
    """Pure-JAX reference (lax.scan, f32) of the same forward pass."""
    x = jnp.transpose(X, (1, 0, 2))
    all_h, all_c = [], []
    for (w_ih_t, w_hh_t, b) in params:
        B = x.shape[1]
        H = w_hh_t.shape[0]

        def step(carry, x_t):
            h, c = carry
            gates = x_t @ w_ih_t + h @ w_hh_t + b
            i_g = jax.nn.sigmoid(gates[:, 0 * H:1 * H])
            f_g = jax.nn.sigmoid(gates[:, 1 * H:2 * H])
            g_g = jnp.tanh(gates[:, 2 * H:3 * H])
            o_g = jax.nn.sigmoid(gates[:, 3 * H:4 * H])
            c_n = f_g * c + i_g * g_g
            h_n = o_g * jnp.tanh(c_n)
            return (h_n, c_n), h_n

        init = (jnp.zeros((B, H), jnp.float32), jnp.zeros((B, H), jnp.float32))
        (h_f, c_f), ht = jax.lax.scan(step, init, x)
        all_h.append(h_f)
        all_c.append(c_f)
        x = ht
    return jnp.transpose(x, (1, 0, 2)), (jnp.stack(all_h), jnp.stack(all_c))


def init_params(key, input_size, n_layers, hidden_size):
    """Deterministic LSTMCell-style params (uniform(-1/sqrt(H), 1/sqrt(H)))."""
    params = []
    bound = 1.0 / (hidden_size ** 0.5)
    for layer in range(n_layers):
        in_sz = input_size if layer == 0 else hidden_size
        key, k1, k2, k3, k4 = jax.random.split(key, 5)
        w_ih = jax.random.uniform(k1, (4 * hidden_size, in_sz),
                                  jnp.float32, -bound, bound)
        w_hh = jax.random.uniform(k2, (4 * hidden_size, hidden_size),
                                  jnp.float32, -bound, bound)
        b_ih = jax.random.uniform(k3, (4 * hidden_size,),
                                  jnp.float32, -bound, bound)
        b_hh = jax.random.uniform(k4, (4 * hidden_size,),
                                  jnp.float32, -bound, bound)
        params.append((w_ih.T, w_hh.T, (b_ih + b_hh)[None, :]))
    return tuple(params)


if __name__ == "__main__":
    key = jax.random.PRNGKey(0)

    # --- Small demo shapes consistent with the module -----------------------
    batch, seq, input_size = 2, 8, 4
    n_layers, hidden_size = 2, 32

    key, kx, kp = jax.random.split(key, 3)
    X = jax.random.normal(kx, (batch, seq, input_size), jnp.float32)
    params = init_params(kp, input_size, n_layers, hidden_size)

    # t_blk=4 -> 2 time blocks, exercising the cross-block recurrent state.
    ht, (all_h, all_c) = lstm_model_forward(X, params, t_blk=4)
    jax.block_until_ready((ht, all_h, all_c))

    ht_ref, (all_h_ref, all_c_ref) = _reference_forward(X, params)
    assert ht.shape == (batch, seq, hidden_size)
    assert all_h.shape == (n_layers, batch, hidden_size)
    assert all_c.shape == (n_layers, batch, hidden_size)
    # bf16 MXU operands (f32 accumulation / state math) -> loosened tolerance.
    assert jnp.allclose(ht, ht_ref, atol=5e-2, rtol=5e-2)
    assert jnp.allclose(all_h, all_h_ref, atol=5e-2, rtol=5e-2)
    assert jnp.allclose(all_c, all_c_ref, atol=5e-2, rtol=5e-2)

    # --- Second config: 2 batch tiles + dual-stream recurrence path ---------
    batch2 = 32
    key, kx2 = jax.random.split(key)
    X2 = jax.random.normal(kx2, (batch2, seq, input_size), jnp.float32)
    ht2, (all_h2, all_c2) = lstm_model_forward(X2, params, t_blk=4, b_tile=16)
    jax.block_until_ready((ht2, all_h2, all_c2))

    ht2_ref, (all_h2_ref, all_c2_ref) = _reference_forward(X2, params)
    assert jnp.allclose(ht2, ht2_ref, atol=5e-2, rtol=5e-2)
    assert jnp.allclose(all_h2, all_h2_ref, atol=5e-2, rtol=5e-2)
    assert jnp.allclose(all_c2, all_c2_ref, atol=5e-2, rtol=5e-2)

    print("KERNEL_OK")
</pallas_src>

<mosaic_0001>
module attributes {stable_mosaic.version = 11 : i64} {
  func.func @_lstm_layer_kernel(%arg0: i32, %arg1: i32, %arg2: memref<1x32x4xbf16, #tpu.memory_space<vmem>>, %arg3: memref<4x128xbf16, #tpu.memory_space<vmem>>, %arg4: memref<32x128xbf16, #tpu.memory_space<vmem>>, %arg5: memref<1x128xf32, #tpu.memory_space<vmem>>, %arg6: memref<1x32x32xbf16, #tpu.memory_space<vmem>>, %arg7: memref<1x8x32xf32, #tpu.memory_space<vmem>>, %arg8: memref<1x8x32xf32, #tpu.memory_space<vmem>>, %arg9: memref<32x128xf32, #tpu.memory_space<vmem>>, %arg10: memref<8x32xf32, #tpu.memory_space<vmem>>, %arg11: memref<8x32xf32, #tpu.memory_space<vmem>>) attributes {dimension_semantics = [#tpu.dimension_semantics<parallel>, #tpu.dimension_semantics<arbitrary>], iteration_bounds = array<i64: 1, 2>, scalar_prefetch = 0 : i64, scratch_operands = 3 : i64, tpu.core_type = #tpu.core_type<tc>, window_params = [{transform_indices = @transform_0, window_bounds = array<i64: 1, 32, 4>}, {pipeline_mode = #tpu.pipeline_mode<synchronous>, transform_indices = @transform_1, window_bounds = array<i64: 4, 128>}, {pipeline_mode = #tpu.pipeline_mode<synchronous>, transform_indices = @transform_2, window_bounds = array<i64: 32, 128>}, {pipeline_mode = #tpu.pipeline_mode<synchronous>, transform_indices = @transform_3, window_bounds = array<i64: 1, 128>}, {transform_indices = @transform_4, window_bounds = array<i64: 1, 32, 32>}, {transform_indices = @transform_5, window_bounds = array<i64: 1, 8, 32>}, {transform_indices = @transform_6, window_bounds = array<i64: 1, 8, 32>}]} {
    %c0_i32 = arith.constant 0 : i32
    %0 = arith.cmpi eq, %arg1, %c0_i32 : i32
    %1 = arith.extui %0 : i1 to i32
    %c0_i32_0 = arith.constant 0 : i32
    %2 = arith.cmpi ne, %1, %c0_i32_0 : i32
    scf.if %2 {
      %cst_77 = arith.constant 0.000000e+00 : f32
      %163 = vector.broadcast %cst_77 : f32 to vector<8x32xf32>
      %c0_78 = arith.constant 0 : index
      %c0_79 = arith.constant 0 : index
      %164 = vector.load %arg10[%c0_78, %c0_79] : memref<8x32xf32, #tpu.memory_space<vmem>>, vector<8x32xf32>
      tpu.vector_store %arg10[%c0_78, %c0_79], %163 {strides = array<i32>} : memref<8x32xf32, #tpu.memory_space<vmem>>, vector<8x32xf32>,
      %cst_80 = arith.constant 0.000000e+00 : f32
      %165 = vector.broadcast %cst_80 : f32 to vector<8x32xf32>
      %c0_81 = arith.constant 0 : index
      %c0_82 = arith.constant 0 : index
      %166 = vector.load %arg11[%c0_81, %c0_82] : memref<8x32xf32, #tpu.memory_space<vmem>>, vector<8x32xf32>
      tpu.vector_store %arg11[%c0_81, %c0_82], %165 {strides = array<i32>} : memref<8x32xf32, #tpu.memory_space<vmem>>, vector<8x32xf32>,
    } else {
    }
    %c0 = arith.constant 0 : index
    %c0_1 = arith.constant 0 : index
    %c0_2 = arith.constant 0 : index
    %3 = vector.load %arg2[%c0, %c0_1, %c0_2] : memref<1x32x4xbf16, #tpu.memory_space<vmem>>, vector<1x32x4xbf16>
    %4 = vector.shape_cast %3 : vector<1x32x4xbf16> to vector<32x4xbf16>
    %c0_3 = arith.constant 0 : index
    %c0_4 = arith.constant 0 : index
    %5 = vector.load %arg3[%c0_3, %c0_4] : memref<4x128xbf16, #tpu.memory_space<vmem>>, vector<4x128xbf16>
    %cst = arith.constant dense<0.000000e+00> : vector<32x128xf32>
    %6 = tpu.matmul %4, %5, %cst {dimension_numbers = #tpu.dot_dimension_numbers<[1], [0], [0], [1], [0, 0, 1, 1], [], []>} : vector<32x4xbf16>, vector<4x128xbf16>, vector<32x128xf32> -> vector<32x128xf32>
    %c0_5 = arith.constant 0 : index
    %c0_6 = arith.constant 0 : index
    %7 = vector.load %arg5[%c0_5, %c0_6] : memref<1x128xf32, #tpu.memory_space<vmem>>, vector<1x128xf32>
    %8 = vector.broadcast %7 : vector<1x128xf32> to vector<32x128xf32>
    %9 = arith.addf %6, %8 : vector<32x128xf32>
    %c0_7 = arith.constant 0 : index
    %c0_8 = arith.constant 0 : index
    %10 = vector.load %arg9[%c0_7, %c0_8] : memref<32x128xf32, #tpu.memory_space<vmem>>, vector<32x128xf32>
    tpu.vector_store %arg9[%c0_7, %c0_8], %9 {strides = array<i32>} : memref<32x128xf32, #tpu.memory_space<vmem>>, vector<32x128xf32>,
    %c0_9 = arith.constant 0 : index
    %c0_10 = arith.constant 0 : index
    %11 = vector.load %arg4[%c0_9, %c0_10] : memref<32x128xbf16, #tpu.memory_space<vmem>>, vector<32x128xbf16>
    %c0_11 = arith.constant 0 : index
    %c0_12 = arith.constant 0 : index
    %12 = vector.load %arg10[%c0_11, %c0_12] : memref<8x32xf32, #tpu.memory_space<vmem>>, vector<8x32xf32>
    %c0_13 = arith.constant 0 : index
    %c0_14 = arith.constant 0 : index
    %13 = vector.load %arg11[%c0_13, %c0_14] : memref<8x32xf32, #tpu.memory_space<vmem>>, vector<8x32xf32>
    %c0_15 = arith.constant 0 : index
    %c0_16 = arith.constant 0 : index
    %14 = vector.load %arg9[%c0_15, %c0_16] : memref<32x128xf32, #tpu.memory_space<vmem>>, vector<8x128xf32>
    %15 = arith.truncf %12 : vector<8x32xf32> to vector<8x32xbf16>
    %cst_17 = arith.constant dense<0.000000e+00> : vector<8x128xf32>
    %16 = tpu.matmul %15, %11, %cst_17 {dimension_numbers = #tpu.dot_dimension_numbers<[1], [0], [0], [1], [0, 0, 1, 1], [], []>} : vector<8x32xbf16>, vector<32x128xbf16>, vector<8x128xf32> -> vector<8x128xf32>
    %17 = arith.addf %14, %16 : vector<8x128xf32>
    %18 = vector.extract_strided_slice %17 {offsets = [0, 0], sizes = [8, 32], strides = [1, 1]} : vector<8x128xf32> to vector<8x32xf32>
    %19 = arith.negf %18 : vector<8x32xf32>
    %20 = math.exp %19 : vector<8x32xf32>
    %cst_18 = arith.constant 1.000000e+00 : f32
    %21 = vector.broadcast %cst_18 : f32 to vector<8x32xf32>
    %22 = arith.addf %21, %20 : vector<8x32xf32>
    %23 = arith.divf %21, %22 : vector<8x32xf32>
    %24 = vector.extract_strided_slice %17 {offsets = [0, 32], sizes = [8, 32], strides = [1, 1]} : vector<8x128xf32> to vector<8x32xf32>
    %25 = arith.negf %24 : vector<8x32xf32>
    %26 = math.exp %25 : vector<8x32xf32>
    %cst_19 = arith.constant 1.000000e+00 : f32
    %27 = vector.broadcast %cst_19 : f32 to vector<8x32xf32>
    %28 = arith.addf %27, %26 : vector<8x32xf32>
    %29 = arith.divf %27, %28 : vector<8x32xf32>
    %30 = vector.extract_strided_slice %17 {offsets = [0, 64], sizes = [8, 32], strides = [1, 1]} : vector<8x128xf32> to vector<8x32xf32>
    %31 = math.tanh %30 : vector<8x32xf32>
    %32 = vector.extract_strided_slice %17 {offsets = [0, 96], sizes = [8, 32], strides = [1, 1]} : vector<8x128xf32> to vector<8x32xf32>
    %33 = arith.negf %32 : vector<8x32xf32>
    %34 = math.exp %33 : vector<8x32xf32>
    %cst_20 = arith.constant 1.000000e+00 : f32
    %35 = vector.broadcast %cst_20 : f32 to vector<8x32xf32>
    %36 = arith.addf %35, %34 : vector<8x32xf32>
    %37 = arith.divf %35, %36 : vector<8x32xf32>
    %38 = arith.mulf %29, %13 : vector<8x32xf32>
    %39 = arith.mulf %23, %31 : vector<8x32xf32>
    %40 = arith.addf %38, %39 : vector<8x32xf32>
    %41 = math.tanh %40 : vector<8x32xf32>
    %42 = arith.mulf %37, %41 : vector<8x32xf32>
    %c0_21 = arith.constant 0 : index
    %c0_22 = arith.constant 0 : index
    %43 = vector.load %arg10[%c0_21, %c0_22] : memref<8x32xf32, #tpu.memory_space<vmem>>, vector<8x32xf32>
    tpu.vector_store %arg10[%c0_21, %c0_22], %42 {strides = array<i32>} : memref<8x32xf32, #tpu.memory_space<vmem>>, vector<8x32xf32>,
    %c0_23 = arith.constant 0 : index
    %c0_24 = arith.constant 0 : index
    %44 = vector.load %arg11[%c0_23, %c0_24] : memref<8x32xf32, #tpu.memory_space<vmem>>, vector<8x32xf32>
    tpu.vector_store %arg11[%c0_23, %c0_24], %40 {strides = array<i32>} : memref<8x32xf32, #tpu.memory_space<vmem>>, vector<8x32xf32>,
    %45 = arith.truncf %42 : vector<8x32xf32> to vector<8x32xbf16>
    %c0_25 = arith.constant 0 : index
    %c0_26 = arith.constant 0 : index
    %c0_27 = arith.constant 0 : index
    %46 = vector.load %arg6[%c0_25, %c0_26, %c0_27] : memref<1x32x32xbf16, #tpu.memory_space<vmem>>, vector<1x8x32xbf16>
    %47 = vector.shape_cast %46 : vector<1x8x32xbf16> to vector<8x32xbf16>
    %48 = vector.shape_cast %45 : vector<8x32xbf16> to vector<1x8x32xbf16>
    tpu.vector_store %arg6[%c0_25, %c0_26, %c0_27], %48 {strides = array<i32>} : memref<1x32x32xbf16, #tpu.memory_space<vmem>>, vector<1x8x32xbf16>,
    %c0_28 = arith.constant 0 : index
    %c0_29 = arith.constant 0 : index
    %49 = vector.load %arg10[%c0_28, %c0_29] : memref<8x32xf32, #tpu.memory_space<vmem>>, vector<8x32xf32>
    %c0_30 = arith.constant 0 : index
    %c0_31 = arith.constant 0 : index
    %50 = vector.load %arg11[%c0_30, %c0_31] : memref<8x32xf32, #tpu.memory_space<vmem>>, vector<8x32xf32>
    %c8 = arith.constant 8 : index
    %c0_32 = arith.constant 0 : index
    %51 = vector.load %arg9[%c8, %c0_32] : memref<32x128xf32, #tpu.memory_space<vmem>>, vector<8x128xf32>
    %52 = arith.truncf %49 : vector<8x32xf32> to vector<8x32xbf16>
    %cst_33 = arith.constant dense<0.000000e+00> : vector<8x128xf32>
    %53 = tpu.matmul %52, %11, %cst_33 {dimension_numbers = #tpu.dot_dimension_numbers<[1], [0], [0], [1], [0, 0, 1, 1], [], []>} : vector<8x32xbf16>, vector<32x128xbf16>, vector<8x128xf32> -> vector<8x128xf32>
    %54 = arith.addf %51, %53 : vector<8x128xf32>
    %55 = vector.extract_strided_slice %54 {offsets = [0, 0], sizes = [8, 32], strides = [1, 1]} : vector<8x128xf32> to vector<8x32xf32>
    %56 = arith.negf %55 : vector<8x32xf32>
    %57 = math.exp %56 : vector<8x32xf32>
    %cst_34 = arith.constant 1.000000e+00 : f32
    %58 = vector.broadcast %cst_34 : f32 to vector<8x32xf32>
    %59 = arith.addf %58, %57 : vector<8x32xf32>
    %60 = arith.divf %58, %59 : vector<8x32xf32>
    %61 = vector.extract_strided_slice %54 {offsets = [0, 32], sizes = [8, 32], strides = [1, 1]} : vector<8x128xf32> to vector<8x32xf32>
    %62 = arith.negf %61 : vector<8x32xf32>
    %63 = math.exp %62 : vector<8x32xf32>
    %cst_35 = arith.constant 1.000000e+00 : f32
    %64 = vector.broadcast %cst_35 : f32 to vector<8x32xf32>
    %65 = arith.addf %64, %63 : vector<8x32xf32>
    %66 = arith.divf %64, %65 : vector<8x32xf32>
    %67 = vector.extract_strided_slice %54 {offsets = [0, 64], sizes = [8, 32], strides = [1, 1]} : vector<8x128xf32> to vector<8x32xf32>
    %68 = math.tanh %67 : vector<8x32xf32>
    %69 = vector.extract_strided_slice %54 {offsets = [0, 96], sizes = [8, 32], strides = [1, 1]} : vector<8x128xf32> to vector<8x32xf32>
    %70 = arith.negf %69 : vector<8x32xf32>
    %71 = math.exp %70 : vector<8x32xf32>
    %cst_36 = arith.constant 1.000000e+00 : f32
    %72 = vector.broadcast %cst_36 : f32 to vector<8x32xf32>
    %73 = arith.addf %72, %71 : vector<8x32xf32>
    %74 = arith.divf %72, %73 : vector<8x32xf32>
    %75 = arith.mulf %66, %50 : vector<8x32xf32>
    %76 = arith.mulf %60, %68 : vector<8x32xf32>
    %77 = arith.addf %75, %76 : vector<8x32xf32>
    %78 = math.tanh %77 : vector<8x32xf32>
    %79 = arith.mulf %74, %78 : vector<8x32xf32>
    %c0_37 = arith.constant 0 : index
    %c0_38 = arith.constant 0 : index
    %80 = vector.load %arg10[%c0_37, %c0_38] : memref<8x32xf32, #tpu.memory_space<vmem>>, vector<8x32xf32>
    tpu.vector_store %arg10[%c0_37, %c0_38], %79 {strides = array<i32>} : memref<8x32xf32, #tpu.memory_space<vmem>>, vector<8x32xf32>,
    %c0_39 = arith.constant 0 : index
    %c0_40 = arith.constant 0 : index
    %81 = vector.load %arg11[%c0_39, %c0_40] : memref<8x32xf32, #tpu.memory_space<vmem>>, vector<8x32xf32>
    tpu.vector_store %arg11[%c0_39, %c0_40], %77 {strides = array<i32>} : memref<8x32xf32, #tpu.memory_space<vmem>>, vector<8x32xf32>,
    %82 = arith.truncf %79 : vector<8x32xf32> to vector<8x32xbf16>
    %c0_41 = arith.constant 0 : index
    %c8_42 = arith.constant 8 : index
    %c0_43 = arith.constant 0 : index
    %83 = vector.load %arg6[%c0_41, %c8_42, %c0_43] : memref<1x32x32xbf16, #tpu.memory_space<vmem>>, vector<1x8x32xbf16>
    %84 = vector.shape_cast %83 : vector<1x8x32xbf16> to vector<8x32xbf16>
    %85 = vector.shape_cast %82 : vector<8x32xbf16> to vector<1x8x32xbf16>
    tpu.vector_store %arg6[%c0_41, %c8_42, %c0_43], %85 {strides = array<i32>} : memref<1x32x32xbf16, #tpu.memory_space<vmem>>, vector<1x8x32xbf16>,
    %c0_44 = arith.constant 0 : index
    %c0_45 = arith.constant 0 : index
    %86 = vector.load %arg10[%c0_44, %c0_45] : memref<8x32xf32, #tpu.memory_space<vmem>>, vector<8x32xf32>
    %c0_46 = arith.constant 0 : index
    %c0_47 = arith.constant 0 : index
    %87 = vector.load %arg11[%c0_46, %c0_47] : memref<8x32xf32, #tpu.memory_space<vmem>>, vector<8x32xf32>
    %c16 = arith.constant 16 : index
    %c0_48 = arith.constant 0 : index
    %88 = vector.load %arg9[%c16, %c0_48] : memref<32x128xf32, #tpu.memory_space<vmem>>, vector<8x128xf32>
    %89 = arith.truncf %86 : vector<8x32xf32> to vector<8x32xbf16>
    %cst_49 = arith.constant dense<0.000000e+00> : vector<8x128xf32>
    %90 = tpu.matmul %89, %11, %cst_49 {dimension_numbers = #tpu.dot_dimension_numbers<[1], [0], [0], [1], [0, 0, 1, 1], [], []>} : vector<8x32xbf16>, vector<32x128xbf16>, vector<8x128xf32> -> vector<8x128xf32>
    %91 = arith.addf %88, %90 : vector<8x128xf32>
    %92 = vector.extract_strided_slice %91 {offsets = [0, 0], sizes = [8, 32], strides = [1, 1]} : vector<8x128xf32> to vector<8x32xf32>
    %93 = arith.negf %92 : vector<8x32xf32>
    %94 = math.exp %93 : vector<8x32xf32>
    %cst_50 = arith.constant 1.000000e+00 : f32
    %95 = vector.broadcast %cst_50 : f32 to vector<8x32xf32>
    %96 = arith.addf %95, %94 : vector<8x32xf32>
    %97 = arith.divf %95, %96 : vector<8x32xf32>
    %98 = vector.extract_strided_slice %91 {offsets = [0, 32], sizes = [8, 32], strides = [1, 1]} : vector<8x128xf32> to vector<8x32xf32>
    %99 = arith.negf %98 : vector<8x32xf32>
    %100 = math.exp %99 : vector<8x32xf32>
    %cst_51 = arith.constant 1.000000e+00 : f32
    %101 = vector.broadcast %cst_51 : f32 to vector<8x32xf32>
    %102 = arith.addf %101, %100 : vector<8x32xf32>
    %103 = arith.divf %101, %102 : vector<8x32xf32>
    %104 = vector.extract_strided_slice %91 {offsets = [0, 64], sizes = [8, 32], strides = [1, 1]} : vector<8x128xf32> to vector<8x32xf32>
    %105 = math.tanh %104 : vector<8x32xf32>
    %106 = vector.extract_strided_slice %91 {offsets = [0, 96], sizes = [8, 32], strides = [1, 1]} : vector<8x128xf32> to vector<8x32xf32>
    %107 = arith.negf %106 : vector<8x32xf32>
    %108 = math.exp %107 : vector<8x32xf32>
    %cst_52 = arith.constant 1.000000e+00 : f32
    %109 = vector.broadcast %cst_52 : f32 to vector<8x32xf32>
    %110 = arith.addf %109, %108 : vector<8x32xf32>
    %111 = arith.divf %109, %110 : vector<8x32xf32>
    %112 = arith.mulf %103, %87 : vector<8x32xf32>
    %113 = arith.mulf %97, %105 : vector<8x32xf32>
    %114 = arith.addf %112, %113 : vector<8x32xf32>
    %115 = math.tanh %114 : vector<8x32xf32>
    %116 = arith.mulf %111, %115 : vector<8x32xf32>
    %c0_53 = arith.constant 0 : index
    %c0_54 = arith.constant 0 : index
    %117 = vector.load %arg10[%c0_53, %c0_54] : memref<8x32xf32, #tpu.memory_space<vmem>>, vector<8x32xf32>
    tpu.vector_store %arg10[%c0_53, %c0_54], %116 {strides = array<i32>} : memref<8x32xf32, #tpu.memory_space<vmem>>, vector<8x32xf32>,
    %c0_55 = arith.constant 0 : index
    %c0_56 = arith.constant 0 : index
    %118 = vector.load %arg11[%c0_55, %c0_56] : memref<8x32xf32, #tpu.memory_space<vmem>>, vector<8x32xf32>
    tpu.vector_store %arg11[%c0_55, %c0_56], %114 {strides = array<i32>} : memref<8x32xf32, #tpu.memory_space<vmem>>, vector<8x32xf32>,
    %119 = arith.truncf %116 : vector<8x32xf32> to vector<8x32xbf16>
    %c0_57 = arith.constant 0 : index
    %c16_58 = arith.constant 16 : index
    %c0_59 = arith.constant 0 : index
    %120 = vector.load %arg6[%c0_57, %c16_58, %c0_59] : memref<1x32x32xbf16, #tpu.memory_space<vmem>>, vector<1x8x32xbf16>
    %121 = vector.shape_cast %120 : vector<1x8x32xbf16> to vector<8x32xbf16>
    %122 = vector.shape_cast %119 : vector<8x32xbf16> to vector<1x8x32xbf16>
    tpu.vector_store %arg6[%c0_57, %c16_58, %c0_59], %122 {strides = array<i32>} : memref<1x32x32xbf16, #tpu.memory_space<vmem>>, vector<1x8x32xbf16>,
    %c0_60 = arith.constant 0 : index
    %c0_61 = arith.constant 0 : index
    %123 = vector.load %arg10[%c0_60, %c0_61] : memref<8x32xf32, #tpu.memory_space<vmem>>, vector<8x32xf32>
    %c0_62 = arith.constant 0 : index
    %c0_63 = arith.constant 0 : index
    %124 = vector.load %arg11[%c0_62, %c0_63] : memref<8x32xf32, #tpu.memory_space<vmem>>, vector<8x32xf32>
    %c24 = arith.constant 24 : index
    %c0_64 = arith.constant 0 : index
    %125 = vector.load %arg9[%c24, %c0_64] : memref<32x128xf32, #tpu.memory_space<vmem>>, vector<8x128xf32>
    %126 = arith.truncf %123 : vector<8x32xf32> to vector<8x32xbf16>
    %cst_65 = arith.constant dense<0.000000e+00> : vector<8x128xf32>
    %127 = tpu.matmul %126, %11, %cst_65 {dimension_numbers = #tpu.dot_dimension_numbers<[1], [0], [0], [1], [0, 0, 1, 1], [], []>} : vector<8x32xbf16>, vector<32x128xbf16>, vector<8x128xf32> -> vector<8x128xf32>
    %128 = arith.addf %125, %127 : vector<8x128xf32>
    %129 = vector.extract_strided_slice %128 {offsets = [0, 0], sizes = [8, 32], strides = [1, 1]} : vector<8x128xf32> to vector<8x32xf32>
    %130 = arith.negf %129 : vector<8x32xf32>
    %131 = math.exp %130 : vector<8x32xf32>
    %cst_66 = arith.constant 1.000000e+00 : f32
    %132 = vector.broadcast %cst_66 : f32 to vector<8x32xf32>
    %133 = arith.addf %132, %131 : vector<8x32xf32>
    %134 = arith.divf %132, %133 : vector<8x32xf32>
    %135 = vector.extract_strided_slice %128 {offsets = [0, 32], sizes = [8, 32], strides = [1, 1]} : vector<8x128xf32> to vector<8x32xf32>
    %136 = arith.negf %135 : vector<8x32xf32>
    %137 = math.exp %136 : vector<8x32xf32>
    %cst_67 = arith.constant 1.000000e+00 : f32
    %138 = vector.broadcast %cst_67 : f32 to vector<8x32xf32>
    %139 = arith.addf %138, %137 : vector<8x32xf32>
    %140 = arith.divf %138, %139 : vector<8x32xf32>
    %141 = vector.extract_strided_slice %128 {offsets = [0, 64], sizes = [8, 32], strides = [1, 1]} : vector<8x128xf32> to vector<8x32xf32>
    %142 = math.tanh %141 : vector<8x32xf32>
    %143 = vector.extract_strided_slice %128 {offsets = [0, 96], sizes = [8, 32], strides = [1, 1]} : vector<8x128xf32> to vector<8x32xf32>
    %144 = arith.negf %143 : vector<8x32xf32>
    %145 = math.exp %144 : vector<8x32xf32>
    %cst_68 = arith.constant 1.000000e+00 : f32
    %146 = vector.broadcast %cst_68 : f32 to vector<8x32xf32>
    %147 = arith.addf %146, %145 : vector<8x32xf32>
    %148 = arith.divf %146, %147 : vector<8x32xf32>
    %149 = arith.mulf %140, %124 : vector<8x32xf32>
    %150 = arith.mulf %134, %142 : vector<8x32xf32>
    %151 = arith.addf %149, %150 : vector<8x32xf32>
    %152 = math.tanh %151 : vector<8x32xf32>
    %153 = arith.mulf %148, %152 : vector<8x32xf32>
    %c0_69 = arith.constant 0 : index
    %c0_70 = arith.constant 0 : index
    %154 = vector.load %arg10[%c0_69, %c0_70] : memref<8x32xf32, #tpu.memory_space<vmem>>, vector<8x32xf32>
    tpu.vector_store %arg10[%c0_69, %c0_70], %153 {strides = array<i32>} : memref<8x32xf32, #tpu.memory_space<vmem>>, vector<8x32xf32>,
    %c0_71 = arith.constant 0 : index
    %c0_72 = arith.constant 0 : index
    %155 = vector.load %arg11[%c0_71, %c0_72] : memref<8x32xf32, #tpu.memory_space<vmem>>, vector<8x32xf32>
    tpu.vector_store %arg11[%c0_71, %c0_72], %151 {strides = array<i32>} : memref<8x32xf32, #tpu.memory_space<vmem>>, vector<8x32xf32>,
    %156 = arith.truncf %153 : vector<8x32xf32> to vector<8x32xbf16>
    %c0_73 = arith.constant 0 : index
    %c24_74 = arith.constant 24 : index
    %c0_75 = arith.constant 0 : index
    %157 = vector.load %arg6[%c0_73, %c24_74, %c0_75] : memref<1x32x32xbf16, #tpu.memory_space<vmem>>, vector<1x8x32xbf16>
    %158 = vector.shape_cast %157 : vector<1x8x32xbf16> to vector<8x32xbf16>
    %159 = vector.shape_cast %156 : vector<8x32xbf16> to vector<1x8x32xbf16>
    tpu.vector_store %arg6[%c0_73, %c24_74, %c0_75], %159 {strides = array<i32>} : memref<1x32x32xbf16, #tpu.memory_space<vmem>>, vector<1x8x32xbf16>,
    %c1_i32 = arith.constant 1 : i32
    %160 = arith.cmpi eq, %arg1, %c1_i32 : i32
    %161 = arith.extui %160 : i1 to i32
    %c0_i32_76 = arith.constant 0 : i32
    %162 = arith.cmpi ne, %161, %c0_i32_76 : i32
    scf.if %162 {
      %c0_77 = arith.constant 0 : index
      %c0_78 = arith.constant 0 : index
      %163 = vector.load %arg10[%c0_77, %c0_78] : memref<8x32xf32, #tpu.memory_space<vmem>>, vector<8x32xf32>
      %c0_79 = arith.constant 0 : index
      %c0_80 = arith.constant 0 : index
      %c0_81 = arith.constant 0 : index
      %164 = vector.load %arg7[%c0_79, %c0_80, %c0_81] : memref<1x8x32xf32, #tpu.memory_space<vmem>>, vector<1x8x32xf32>
      %165 = vector.shape_cast %164 : vector<1x8x32xf32> to vector<8x32xf32>
      %166 = vector.shape_cast %163 : vector<8x32xf32> to vector<1x8x32xf32>
      tpu.vector_store %arg7[%c0_79, %c0_80, %c0_81], %166 {strides = array<i32>} : memref<1x8x32xf32, #tpu.memory_space<vmem>>, vector<1x8x32xf32>,
      %c0_82 = arith.constant 0 : index
      %c0_83 = arith.constant 0 : index
      %167 = vector.load %arg11[%c0_82, %c0_83] : memref<8x32xf32, #tpu.memory_space<vmem>>, vector<8x32xf32>
      %c0_84 = arith.constant 0 : index
      %c0_85 = arith.constant 0 : index
      %c0_86 = arith.constant 0 : index
      %168 = vector.load %arg8[%c0_84, %c0_85, %c0_86] : memref<1x8x32xf32, #tpu.memory_space<vmem>>, vector<1x8x32xf32>
      %169 = vector.shape_cast %168 : vector<1x8x32xf32> to vector<8x32xf32>
      %170 = vector.shape_cast %167 : vector<8x32xf32> to vector<1x8x32xf32>
      tpu.vector_store %arg8[%c0_84, %c0_85, %c0_86], %170 {strides = array<i32>} : memref<1x8x32xf32, #tpu.memory_space<vmem>>, vector<1x8x32xf32>,
    } else {
    }
    return
  }
  func.func @transform_0(%arg0: i32, %arg1: i32) -> (i32, i32, i32) {
    %c0_i32 = arith.constant 0 : i32
    %c0_i32_0 = arith.constant 0 : i32
    return %arg0, %arg1, %c0_i32 : i32, i32, i32
  }
  func.func @transform_1(%arg0: i32, %arg1: i32) -> (i32, i32) {
    %c0_i32 = arith.constant 0 : i32
    %c0_i32_0 = arith.constant 0 : i32
    %c0_i32_1 = arith.constant 0 : i32
    return %c0_i32, %c0_i32_0 : i32, i32
  }
  func.func @transform_2(%arg0: i32, %arg1: i32) -> (i32, i32) {
    %c0_i32 = arith.constant 0 : i32
    %c0_i32_0 = arith.constant 0 : i32
    %c0_i32_1 = arith.constant 0 : i32
    return %c0_i32, %c0_i32_0 : i32, i32
  }
  func.func @transform_3(%arg0: i32, %arg1: i32) -> (i32, i32) {
    %c0_i32 = arith.constant 0 : i32
    %c0_i32_0 = arith.constant 0 : i32
    %c0_i32_1 = arith.constant 0 : i32
    return %c0_i32, %c0_i32_0 : i32, i32
  }
  func.func @transform_4(%arg0: i32, %arg1: i32) -> (i32, i32, i32) {
    %c0_i32 = arith.constant 0 : i32
    %c0_i32_0 = arith.constant 0 : i32
    return %arg0, %arg1, %c0_i32 : i32, i32, i32
  }
  func.func @transform_5(%arg0: i32, %arg1: i32) -> (i32, i32, i32) {
    %c0_i32 = arith.constant 0 : i32
    %c0_i32_0 = arith.constant 0 : i32
    %c0_i32_1 = arith.constant 0 : i32
    return %arg0, %c0_i32, %c0_i32_0 : i32, i32, i32
  }
  func.func @transform_6(%arg0: i32, %arg1: i32) -> (i32, i32, i32) {
    %c0_i32 = arith.constant 0 : i32
    %c0_i32_0 = arith.constant 0 : i32
    %c0_i32_1 = arith.constant 0 : i32
    return %arg0, %c0_i32, %c0_i32_0 : i32, i32, i32
  }
}

module attributes {stable_mosaic.version = 11 : i64} {
  func.func @_lstm_layer_kernel(%arg0: i32, %arg1: i32, %arg2: memref<1x32x32xbf16, #tpu.memory_space<vmem>>, %arg3: memref<32x128xbf16, #tpu.memory_space<vmem>>, %arg4: memref<32x128xbf16, #tpu.memory_space<vmem>>, %arg5: memref<1x128xf32, #tpu.memory_space<vmem>>, %arg6: memref<1x32x32xbf16, #tpu.memory_space<vmem>>, %arg7: memref<1x8x32xf32, #tpu.memory_space<vmem>>, %arg8: memref<1x8x32xf32, #tpu.memory_space<vmem>>, %arg9: memref<32x128xf32, #tpu.memory_space<vmem>>, %arg10: memref<8x32xf32, #tpu.memory_space<vmem>>, %arg11: memref<8x32xf32, #tpu.memory_space<vmem>>) attributes {dimension_semantics = [#tpu.dimension_semantics<parallel>, #tpu.dimension_semantics<arbitrary>], iteration_bounds = array<i64: 1, 2>, scalar_prefetch = 0 : i64, scratch_operands = 3 : i64, tpu.core_type = #tpu.core_type<tc>, window_params = [{transform_indices = @transform_0, window_bounds = array<i64: 1, 32, 32>}, {pipeline_mode = #tpu.pipeline_mode<synchronous>, transform_indices = @transform_1, window_bounds = array<i64: 32, 128>}, {pipeline_mode = #tpu.pipeline_mode<synchronous>, transform_indices = @transform_2, window_bounds = array<i64: 32, 128>}, {pipeline_mode = #tpu.pipeline_mode<synchronous>, transform_indices = @transform_3, window_bounds = array<i64: 1, 128>}, {transform_indices = @transform_4, window_bounds = array<i64: 1, 32, 32>}, {transform_indices = @transform_5, window_bounds = array<i64: 1, 8, 32>}, {transform_indices = @transform_6, window_bounds = array<i64: 1, 8, 32>}]} {
    %c0_i32 = arith.constant 0 : i32
    %0 = arith.cmpi eq, %arg1, %c0_i32 : i32
    %1 = arith.extui %0 : i1 to i32
    %c0_i32_0 = arith.constant 0 : i32
    %2 = arith.cmpi ne, %1, %c0_i32_0 : i32
    scf.if %2 {
      %cst_77 = arith.constant 0.000000e+00 : f32
      %163 = vector.broadcast %cst_77 : f32 to vector<8x32xf32>
      %c0_78 = arith.constant 0 : index
      %c0_79 = arith.constant 0 : index
      %164 = vector.load %arg10[%c0_78, %c0_79] : memref<8x32xf32, #tpu.memory_space<vmem>>, vector<8x32xf32>
      tpu.vector_store %arg10[%c0_78, %c0_79], %163 {strides = array<i32>} : memref<8x32xf32, #tpu.memory_space<vmem>>, vector<8x32xf32>,
      %cst_80 = arith.constant 0.000000e+00 : f32
      %165 = vector.broadcast %cst_80 : f32 to vector<8x32xf32>
      %c0_81 = arith.constant 0 : index
      %c0_82 = arith.constant 0 : index
      %166 = vector.load %arg11[%c0_81, %c0_82] : memref<8x32xf32, #tpu.memory_space<vmem>>, vector<8x32xf32>
      tpu.vector_store %arg11[%c0_81, %c0_82], %165 {strides = array<i32>} : memref<8x32xf32, #tpu.memory_space<vmem>>, vector<8x32xf32>,
    } else {
    }
    %c0 = arith.constant 0 : index
    %c0_1 = arith.constant 0 : index
    %c0_2 = arith.constant 0 : index
    %3 = vector.load %arg2[%c0, %c0_1, %c0_2] : memref<1x32x32xbf16, #tpu.memory_space<vmem>>, vector<1x32x32xbf16>
    %4 = vector.shape_cast %3 : vector<1x32x32xbf16> to vector<32x32xbf16>
    %c0_3 = arith.constant 0 : index
    %c0_4 = arith.constant 0 : index
    %5 = vector.load %arg3[%c0_3, %c0_4] : memref<32x128xbf16, #tpu.memory_space<vmem>>, vector<32x128xbf16>
    %cst = arith.constant dense<0.000000e+00> : vector<32x128xf32>
    %6 = tpu.matmul %4, %5, %cst {dimension_numbers = #tpu.dot_dimension_numbers<[1], [0], [0], [1], [0, 0, 1, 1], [], []>} : vector<32x32xbf16>, vector<32x128xbf16>, vector<32x128xf32> -> vector<32x128xf32>
    %c0_5 = arith.constant 0 : index
    %c0_6 = arith.constant 0 : index
    %7 = vector.load %arg5[%c0_5, %c0_6] : memref<1x128xf32, #tpu.memory_space<vmem>>, vector<1x128xf32>
    %8 = vector.broadcast %7 : vector<1x128xf32> to vector<32x128xf32>
    %9 = arith.addf %6, %8 : vector<32x128xf32>
    %c0_7 = arith.constant 0 : index
    %c0_8 = arith.constant 0 : index
    %10 = vector.load %arg9[%c0_7, %c0_8] : memref<32x128xf32, #tpu.memory_space<vmem>>, vector<32x128xf32>
    tpu.vector_store %arg9[%c0_7, %c0_8], %9 {strides = array<i32>} : memref<32x128xf32, #tpu.memory_space<vmem>>, vector<32x128xf32>,
    %c0_9 = arith.constant 0 : index
    %c0_10 = arith.constant 0 : index
    %11 = vector.load %arg4[%c0_9, %c0_10] : memref<32x128xbf16, #tpu.memory_space<vmem>>, vector<32x128xbf16>
    %c0_11 = arith.constant 0 : index
    %c0_12 = arith.constant 0 : index
    %12 = vector.load %arg10[%c0_11, %c0_12] : memref<8x32xf32, #tpu.memory_space<vmem>>, vector<8x32xf32>
    %c0_13 = arith.constant 0 : index
    %c0_14 = arith.constant 0 : index
    %13 = vector.load %arg11[%c0_13, %c0_14] : memref<8x32xf32, #tpu.memory_space<vmem>>, vector<8x32xf32>
    %c0_15 = arith.constant 0 : index
    %c0_16 = arith.constant 0 : index
    %14 = vector.load %arg9[%c0_15, %c0_16] : memref<32x128xf32, #tpu.memory_space<vmem>>, vector<8x128xf32>
    %15 = arith.truncf %12 : vector<8x32xf32> to vector<8x32xbf16>
    %cst_17 = arith.constant dense<0.000000e+00> : vector<8x128xf32>
    %16 = tpu.matmul %15, %11, %cst_17 {dimension_numbers = #tpu.dot_dimension_numbers<[1], [0], [0], [1], [0, 0, 1, 1], [], []>} : vector<8x32xbf16>, vector<32x128xbf16>, vector<8x128xf32> -> vector<8x128xf32>
    %17 = arith.addf %14, %16 : vector<8x128xf32>
    %18 = vector.extract_strided_slice %17 {offsets = [0, 0], sizes = [8, 32], strides = [1, 1]} : vector<8x128xf32> to vector<8x32xf32>
    %19 = arith.negf %18 : vector<8x32xf32>
    %20 = math.exp %19 : vector<8x32xf32>
    %cst_18 = arith.constant 1.000000e+00 : f32
    %21 = vector.broadcast %cst_18 : f32 to vector<8x32xf32>
    %22 = arith.addf %21, %20 : vector<8x32xf32>
    %23 = arith.divf %21, %22 : vector<8x32xf32>
    %24 = vector.extract_strided_slice %17 {offsets = [0, 32], sizes = [8, 32], strides = [1, 1]} : vector<8x128xf32> to vector<8x32xf32>
    %25 = arith.negf %24 : vector<8x32xf32>
    %26 = math.exp %25 : vector<8x32xf32>
    %cst_19 = arith.constant 1.000000e+00 : f32
    %27 = vector.broadcast %cst_19 : f32 to vector<8x32xf32>
    %28 = arith.addf %27, %26 : vector<8x32xf32>
    %29 = arith.divf %27, %28 : vector<8x32xf32>
    %30 = vector.extract_strided_slice %17 {offsets = [0, 64], sizes = [8, 32], strides = [1, 1]} : vector<8x128xf32> to vector<8x32xf32>
    %31 = math.tanh %30 : vector<8x32xf32>
    %32 = vector.extract_strided_slice %17 {offsets = [0, 96], sizes = [8, 32], strides = [1, 1]} : vector<8x128xf32> to vector<8x32xf32>
    %33 = arith.negf %32 : vector<8x32xf32>
    %34 = math.exp %33 : vector<8x32xf32>
    %cst_20 = arith.constant 1.000000e+00 : f32
    %35 = vector.broadcast %cst_20 : f32 to vector<8x32xf32>
    %36 = arith.addf %35, %34 : vector<8x32xf32>
    %37 = arith.divf %35, %36 : vector<8x32xf32>
    %38 = arith.mulf %29, %13 : vector<8x32xf32>
    %39 = arith.mulf %23, %31 : vector<8x32xf32>
    %40 = arith.addf %38, %39 : vector<8x32xf32>
    %41 = math.tanh %40 : vector<8x32xf32>
    %42 = arith.mulf %37, %41 : vector<8x32xf32>
    %c0_21 = arith.constant 0 : index
    %c0_22 = arith.constant 0 : index
    %43 = vector.load %arg10[%c0_21, %c0_22] : memref<8x32xf32, #tpu.memory_space<vmem>>, vector<8x32xf32>
    tpu.vector_store %arg10[%c0_21, %c0_22], %42 {strides = array<i32>} : memref<8x32xf32, #tpu.memory_space<vmem>>, vector<8x32xf32>,
    %c0_23 = arith.constant 0 : index
    %c0_24 = arith.constant 0 : index
    %44 = vector.load %arg11[%c0_23, %c0_24] : memref<8x32xf32, #tpu.memory_space<vmem>>, vector<8x32xf32>
    tpu.vector_store %arg11[%c0_23, %c0_24], %40 {strides = array<i32>} : memref<8x32xf32, #tpu.memory_space<vmem>>, vector<8x32xf32>,
    %45 = arith.truncf %42 : vector<8x32xf32> to vector<8x32xbf16>
    %c0_25 = arith.constant 0 : index
    %c0_26 = arith.constant 0 : index
    %c0_27 = arith.constant 0 : index
    %46 = vector.load %arg6[%c0_25, %c0_26, %c0_27] : memref<1x32x32xbf16, #tpu.memory_space<vmem>>, vector<1x8x32xbf16>
    %47 = vector.shape_cast %46 : vector<1x8x32xbf16> to vector<8x32xbf16>
    %48 = vector.shape_cast %45 : vector<8x32xbf16> to vector<1x8x32xbf16>
    tpu.vector_store %arg6[%c0_25, %c0_26, %c0_27], %48 {strides = array<i32>} : memref<1x32x32xbf16, #tpu.memory_space<vmem>>, vector<1x8x32xbf16>,
    %c0_28 = arith.constant 0 : index
    %c0_29 = arith.constant 0 : index
    %49 = vector.load %arg10[%c0_28, %c0_29] : memref<8x32xf32, #tpu.memory_space<vmem>>, vector<8x32xf32>
    %c0_30 = arith.constant 0 : index
    %c0_31 = arith.constant 0 : index
    %50 = vector.load %arg11[%c0_30, %c0_31] : memref<8x32xf32, #tpu.memory_space<vmem>>, vector<8x32xf32>
    %c8 = arith.constant 8 : index
    %c0_32 = arith.constant 0 : index
    %51 = vector.load %arg9[%c8, %c0_32] : memref<32x128xf32, #tpu.memory_space<vmem>>, vector<8x128xf32>
    %52 = arith.truncf %49 : vector<8x32xf32> to vector<8x32xbf16>
    %cst_33 = arith.constant dense<0.000000e+00> : vector<8x128xf32>
    %53 = tpu.matmul %52, %11, %cst_33 {dimension_numbers = #tpu.dot_dimension_numbers<[1], [0], [0], [1], [0, 0, 1, 1], [], []>} : vector<8x32xbf16>, vector<32x128xbf16>, vector<8x128xf32> -> vector<8x128xf32>
    %54 = arith.addf %51, %53 : vector<8x128xf32>
    %55 = vector.extract_strided_slice %54 {offsets = [0, 0], sizes = [8, 32], strides = [1, 1]} : vector<8x128xf32> to vector<8x32xf32>
    %56 = arith.negf %55 : vector<8x32xf32>
    %57 = math.exp %56 : vector<8x32xf32>
    %cst_34 = arith.constant 1.000000e+00 : f32
    %58 = vector.broadcast %cst_34 : f32 to vector<8x32xf32>
    %59 = arith.addf %58, %57 : vector<8x32xf32>
    %60 = arith.divf %58, %59 : vector<8x32xf32>
    %61 = vector.extract_strided_slice %54 {offsets = [0, 32], sizes = [8, 32], strides = [1, 1]} : vector<8x128xf32> to vector<8x32xf32>
    %62 = arith.negf %61 : vector<8x32xf32>
    %63 = math.exp %62 : vector<8x32xf32>
    %cst_35 = arith.constant 1.000000e+00 : f32
    %64 = vector.broadcast %cst_35 : f32 to vector<8x32xf32>
    %65 = arith.addf %64, %63 : vector<8x32xf32>
    %66 = arith.divf %64, %65 : vector<8x32xf32>
    %67 = vector.extract_strided_slice %54 {offsets = [0, 64], sizes = [8, 32], strides = [1, 1]} : vector<8x128xf32> to vector<8x32xf32>
    %68 = math.tanh %67 : vector<8x32xf32>
    %69 = vector.extract_strided_slice %54 {offsets = [0, 96], sizes = [8, 32], strides = [1, 1]} : vector<8x128xf32> to vector<8x32xf32>
    %70 = arith.negf %69 : vector<8x32xf32>
    %71 = math.exp %70 : vector<8x32xf32>
    %cst_36 = arith.constant 1.000000e+00 : f32
    %72 = vector.broadcast %cst_36 : f32 to vector<8x32xf32>
    %73 = arith.addf %72, %71 : vector<8x32xf32>
    %74 = arith.divf %72, %73 : vector<8x32xf32>
    %75 = arith.mulf %66, %50 : vector<8x32xf32>
    %76 = arith.mulf %60, %68 : vector<8x32xf32>
    %77 = arith.addf %75, %76 : vector<8x32xf32>
    %78 = math.tanh %77 : vector<8x32xf32>
    %79 = arith.mulf %74, %78 : vector<8x32xf32>
    %c0_37 = arith.constant 0 : index
    %c0_38 = arith.constant 0 : index
    %80 = vector.load %arg10[%c0_37, %c0_38] : memref<8x32xf32, #tpu.memory_space<vmem>>, vector<8x32xf32>
    tpu.vector_store %arg10[%c0_37, %c0_38], %79 {strides = array<i32>} : memref<8x32xf32, #tpu.memory_space<vmem>>, vector<8x32xf32>,
    %c0_39 = arith.constant 0 : index
    %c0_40 = arith.constant 0 : index
    %81 = vector.load %arg11[%c0_39, %c0_40] : memref<8x32xf32, #tpu.memory_space<vmem>>, vector<8x32xf32>
    tpu.vector_store %arg11[%c0_39, %c0_40], %77 {strides = array<i32>} : memref<8x32xf32, #tpu.memory_space<vmem>>, vector<8x32xf32>,
    %82 = arith.truncf %79 : vector<8x32xf32> to vector<8x32xbf16>
    %c0_41 = arith.constant 0 : index
    %c8_42 = arith.constant 8 : index
    %c0_43 = arith.constant 0 : index
    %83 = vector.load %arg6[%c0_41, %c8_42, %c0_43] : memref<1x32x32xbf16, #tpu.memory_space<vmem>>, vector<1x8x32xbf16>
    %84 = vector.shape_cast %83 : vector<1x8x32xbf16> to vector<8x32xbf16>
    %85 = vector.shape_cast %82 : vector<8x32xbf16> to vector<1x8x32xbf16>
    tpu.vector_store %arg6[%c0_41, %c8_42, %c0_43], %85 {strides = array<i32>} : memref<1x32x32xbf16, #tpu.memory_space<vmem>>, vector<1x8x32xbf16>,
    %c0_44 = arith.constant 0 : index
    %c0_45 = arith.constant 0 : index
    %86 = vector.load %arg10[%c0_44, %c0_45] : memref<8x32xf32, #tpu.memory_space<vmem>>, vector<8x32xf32>
    %c0_46 = arith.constant 0 : index
    %c0_47 = arith.constant 0 : index
    %87 = vector.load %arg11[%c0_46, %c0_47] : memref<8x32xf32, #tpu.memory_space<vmem>>, vector<8x32xf32>
    %c16 = arith.constant 16 : index
    %c0_48 = arith.constant 0 : index
    %88 = vector.load %arg9[%c16, %c0_48] : memref<32x128xf32, #tpu.memory_space<vmem>>, vector<8x128xf32>
    %89 = arith.truncf %86 : vector<8x32xf32> to vector<8x32xbf16>
    %cst_49 = arith.constant dense<0.000000e+00> : vector<8x128xf32>
    %90 = tpu.matmul %89, %11, %cst_49 {dimension_numbers = #tpu.dot_dimension_numbers<[1], [0], [0], [1], [0, 0, 1, 1], [], []>} : vector<8x32xbf16>, vector<32x128xbf16>, vector<8x128xf32> -> vector<8x128xf32>
    %91 = arith.addf %88, %90 : vector<8x128xf32>
    %92 = vector.extract_strided_slice %91 {offsets = [0, 0], sizes = [8, 32], strides = [1, 1]} : vector<8x128xf32> to vector<8x32xf32>
    %93 = arith.negf %92 : vector<8x32xf32>
    %94 = math.exp %93 : vector<8x32xf32>
    %cst_50 = arith.constant 1.000000e+00 : f32
    %95 = vector.broadcast %cst_50 : f32 to vector<8x32xf32>
    %96 = arith.addf %95, %94 : vector<8x32xf32>
    %97 = arith.divf %95, %96 : vector<8x32xf32>
    %98 = vector.extract_strided_slice %91 {offsets = [0, 32], sizes = [8, 32], strides = [1, 1]} : vector<8x128xf32> to vector<8x32xf32>
    %99 = arith.negf %98 : vector<8x32xf32>
    %100 = math.exp %99 : vector<8x32xf32>
    %cst_51 = arith.constant 1.000000e+00 : f32
    %101 = vector.broadcast %cst_51 : f32 to vector<8x32xf32>
    %102 = arith.addf %101, %100 : vector<8x32xf32>
    %103 = arith.divf %101, %102 : vector<8x32xf32>
    %104 = vector.extract_strided_slice %91 {offsets = [0, 64], sizes = [8, 32], strides = [1, 1]} : vector<8x128xf32> to vector<8x32xf32>
    %105 = math.tanh %104 : vector<8x32xf32>
    %106 = vector.extract_strided_slice %91 {offsets = [0, 96], sizes = [8, 32], strides = [1, 1]} : vector<8x128xf32> to vector<8x32xf32>
    %107 = arith.negf %106 : vector<8x32xf32>
    %108 = math.exp %107 : vector<8x32xf32>
    %cst_52 = arith.constant 1.000000e+00 : f32
    %109 = vector.broadcast %cst_52 : f32 to vector<8x32xf32>
    %110 = arith.addf %109, %108 : vector<8x32xf32>
    %111 = arith.divf %109, %110 : vector<8x32xf32>
    %112 = arith.mulf %103, %87 : vector<8x32xf32>
    %113 = arith.mulf %97, %105 : vector<8x32xf32>
    %114 = arith.addf %112, %113 : vector<8x32xf32>
    %115 = math.tanh %114 : vector<8x32xf32>
    %116 = arith.mulf %111, %115 : vector<8x32xf32>
    %c0_53 = arith.constant 0 : index
    %c0_54 = arith.constant 0 : index
    %117 = vector.load %arg10[%c0_53, %c0_54] : memref<8x32xf32, #tpu.memory_space<vmem>>, vector<8x32xf32>
    tpu.vector_store %arg10[%c0_53, %c0_54], %116 {strides = array<i32>} : memref<8x32xf32, #tpu.memory_space<vmem>>, vector<8x32xf32>,
    %c0_55 = arith.constant 0 : index
    %c0_56 = arith.constant 0 : index
    %118 = vector.load %arg11[%c0_55, %c0_56] : memref<8x32xf32, #tpu.memory_space<vmem>>, vector<8x32xf32>
    tpu.vector_store %arg11[%c0_55, %c0_56], %114 {strides = array<i32>} : memref<8x32xf32, #tpu.memory_space<vmem>>, vector<8x32xf32>,
    %119 = arith.truncf %116 : vector<8x32xf32> to vector<8x32xbf16>
    %c0_57 = arith.constant 0 : index
    %c16_58 = arith.constant 16 : index
    %c0_59 = arith.constant 0 : index
    %120 = vector.load %arg6[%c0_57, %c16_58, %c0_59] : memref<1x32x32xbf16, #tpu.memory_space<vmem>>, vector<1x8x32xbf16>
    %121 = vector.shape_cast %120 : vector<1x8x32xbf16> to vector<8x32xbf16>
    %122 = vector.shape_cast %119 : vector<8x32xbf16> to vector<1x8x32xbf16>
    tpu.vector_store %arg6[%c0_57, %c16_58, %c0_59], %122 {strides = array<i32>} : memref<1x32x32xbf16, #tpu.memory_space<vmem>>, vector<1x8x32xbf16>,
    %c0_60 = arith.constant 0 : index
    %c0_61 = arith.constant 0 : index
    %123 = vector.load %arg10[%c0_60, %c0_61] : memref<8x32xf32, #tpu.memory_space<vmem>>, vector<8x32xf32>
    %c0_62 = arith.constant 0 : index
    %c0_63 = arith.constant 0 : index
    %124 = vector.load %arg11[%c0_62, %c0_63] : memref<8x32xf32, #tpu.memory_space<vmem>>, vector<8x32xf32>
    %c24 = arith.constant 24 : index
    %c0_64 = arith.constant 0 : index
    %125 = vector.load %arg9[%c24, %c0_64] : memref<32x128xf32, #tpu.memory_space<vmem>>, vector<8x128xf32>
    %126 = arith.truncf %123 : vector<8x32xf32> to vector<8x32xbf16>
    %cst_65 = arith.constant dense<0.000000e+00> : vector<8x128xf32>
    %127 = tpu.matmul %126, %11, %cst_65 {dimension_numbers = #tpu.dot_dimension_numbers<[1], [0], [0], [1], [0, 0, 1, 1], [], []>} : vector<8x32xbf16>, vector<32x128xbf16>, vector<8x128xf32> -> vector<8x128xf32>
    %128 = arith.addf %125, %127 : vector<8x128xf32>
    %129 = vector.extract_strided_slice %128 {offsets = [0, 0], sizes = [8, 32], strides = [1, 1]} : vector<8x128xf32> to vector<8x32xf32>
    %130 = arith.negf %129 : vector<8x32xf32>
    %131 = math.exp %130 : vector<8x32xf32>
    %cst_66 = arith.constant 1.000000e+00 : f32
    %132 = vector.broadcast %cst_66 : f32 to vector<8x32xf32>
    %133 = arith.addf %132, %131 : vector<8x32xf32>
    %134 = arith.divf %132, %133 : vector<8x32xf32>
    %135 = vector.extract_strided_slice %128 {offsets = [0, 32], sizes = [8, 32], strides = [1, 1]} : vector<8x128xf32> to vector<8x32xf32>
    %136 = arith.negf %135 : vector<8x32xf32>
    %137 = math.exp %136 : vector<8x32xf32>
    %cst_67 = arith.constant 1.000000e+00 : f32
    %138 = vector.broadcast %cst_67 : f32 to vector<8x32xf32>
    %139 = arith.addf %138, %137 : vector<8x32xf32>
    %140 = arith.divf %138, %139 : vector<8x32xf32>
    %141 = vector.extract_strided_slice %128 {offsets = [0, 64], sizes = [8, 32], strides = [1, 1]} : vector<8x128xf32> to vector<8x32xf32>
    %142 = math.tanh %141 : vector<8x32xf32>
    %143 = vector.extract_strided_slice %128 {offsets = [0, 96], sizes = [8, 32], strides = [1, 1]} : vector<8x128xf32> to vector<8x32xf32>
    %144 = arith.negf %143 : vector<8x32xf32>
    %145 = math.exp %144 : vector<8x32xf32>
    %cst_68 = arith.constant 1.000000e+00 : f32
    %146 = vector.broadcast %cst_68 : f32 to vector<8x32xf32>
    %147 = arith.addf %146, %145 : vector<8x32xf32>
    %148 = arith.divf %146, %147 : vector<8x32xf32>
    %149 = arith.mulf %140, %124 : vector<8x32xf32>
    %150 = arith.mulf %134, %142 : vector<8x32xf32>
    %151 = arith.addf %149, %150 : vector<8x32xf32>
    %152 = math.tanh %151 : vector<8x32xf32>
    %153 = arith.mulf %148, %152 : vector<8x32xf32>
    %c0_69 = arith.constant 0 : index
    %c0_70 = arith.constant 0 : index
    %154 = vector.load %arg10[%c0_69, %c0_70] : memref<8x32xf32, #tpu.memory_space<vmem>>, vector<8x32xf32>
    tpu.vector_store %arg10[%c0_69, %c0_70], %153 {strides = array<i32>} : memref<8x32xf32, #tpu.memory_space<vmem>>, vector<8x32xf32>,
    %c0_71 = arith.constant 0 : index
    %c0_72 = arith.constant 0 : index
    %155 = vector.load %arg11[%c0_71, %c0_72] : memref<8x32xf32, #tpu.memory_space<vmem>>, vector<8x32xf32>
    tpu.vector_store %arg11[%c0_71, %c0_72], %151 {strides = array<i32>} : memref<8x32xf32, #tpu.memory_space<vmem>>, vector<8x32xf32>,
    %156 = arith.truncf %153 : vector<8x32xf32> to vector<8x32xbf16>
    %c0_73 = arith.constant 0 : index
    %c24_74 = arith.constant 24 : index
    %c0_75 = arith.constant 0 : index
    %157 = vector.load %arg6[%c0_73, %c24_74, %c0_75] : memref<1x32x32xbf16, #tpu.memory_space<vmem>>, vector<1x8x32xbf16>
    %158 = vector.shape_cast %157 : vector<1x8x32xbf16> to vector<8x32xbf16>
    %159 = vector.shape_cast %156 : vector<8x32xbf16> to vector<1x8x32xbf16>
    tpu.vector_store %arg6[%c0_73, %c24_74, %c0_75], %159 {strides = array<i32>} : memref<1x32x32xbf16, #tpu.memory_space<vmem>>, vector<1x8x32xbf16>,
    %c1_i32 = arith.constant 1 : i32
    %160 = arith.cmpi eq, %arg1, %c1_i32 : i32
    %161 = arith.extui %160 : i1 to i32
    %c0_i32_76 = arith.constant 0 : i32
    %162 = arith.cmpi ne, %161, %c0_i32_76 : i32
    scf.if %162 {
      %c0_77 = arith.constant 0 : index
      %c0_78 = arith.constant 0 : index
      %163 = vector.load %arg10[%c0_77, %c0_78] : memref<8x32xf32, #tpu.memory_space<vmem>>, vector<8x32xf32>
      %c0_79 = arith.constant 0 : index
      %c0_80 = arith.constant 0 : index
      %c0_81 = arith.constant 0 : index
      %164 = vector.load %arg7[%c0_79, %c0_80, %c0_81] : memref<1x8x32xf32, #tpu.memory_space<vmem>>, vector<1x8x32xf32>
      %165 = vector.shape_cast %164 : vector<1x8x32xf32> to vector<8x32xf32>
      %166 = vector.shape_cast %163 : vector<8x32xf32> to vector<1x8x32xf32>
      tpu.vector_store %arg7[%c0_79, %c0_80, %c0_81], %166 {strides = array<i32>} : memref<1x8x32xf32, #tpu.memory_space<vmem>>, vector<1x8x32xf32>,
      %c0_82 = arith.constant 0 : index
      %c0_83 = arith.constant 0 : index
      %167 = vector.load %arg11[%c0_82, %c0_83] : memref<8x32xf32, #tpu.memory_space<vmem>>, vector<8x32xf32>
      %c0_84 = arith.constant 0 : index
      %c0_85 = arith.constant 0 : index
      %c0_86 = arith.constant 0 : index
      %168 = vector.load %arg8[%c0_84, %c0_85, %c0_86] : memref<1x8x32xf32, #tpu.memory_space<vmem>>, vector<1x8x32xf32>
      %169 = vector.shape_cast %168 : vector<1x8x32xf32> to vector<8x32xf32>
      %170 = vector.shape_cast %167 : vector<8x32xf32> to vector<1x8x32xf32>
      tpu.vector_store %arg8[%c0_84, %c0_85, %c0_86], %170 {strides = array<i32>} : memref<1x8x32xf32, #tpu.memory_space<vmem>>, vector<1x8x32xf32>,
    } else {
    }
    return
  }
  func.func @transform_0(%arg0: i32, %arg1: i32) -> (i32, i32, i32) {
    %c0_i32 = arith.constant 0 : i32
    %c0_i32_0 = arith.constant 0 : i32
    return %arg0, %arg1, %c0_i32 : i32, i32, i32
  }
  func.func @transform_1(%arg0: i32, %arg1: i32) -> (i32, i32) {
    %c0_i32 = arith.constant 0 : i32
    %c0_i32_0 = arith.constant 0 : i32
    %c0_i32_1 = arith.constant 0 : i32
    return %c0_i32, %c0_i32_0 : i32, i32
  }
  func.func @transform_2(%arg0: i32, %arg1: i32) -> (i32, i32) {
    %c0_i32 = arith.constant 0 : i32
    %c0_i32_0 = arith.constant 0 : i32
    %c0_i32_1 = arith.constant 0 : i32
    return %c0_i32, %c0_i32_0 : i32, i32
  }
  func.func @transform_3(%arg0: i32, %arg1: i32) -> (i32, i32) {
    %c0_i32 = arith.constant 0 : i32
    %c0_i32_0 = arith.constant 0 : i32
    %c0_i32_1 = arith.constant 0 : i32
    return %c0_i32, %c0_i32_0 : i32, i32
  }
  func.func @transform_4(%arg0: i32, %arg1: i32) -> (i32, i32, i32) {
    %c0_i32 = arith.constant 0 : i32
    %c0_i32_0 = arith.constant 0 : i32
    return %arg0, %arg1, %c0_i32 : i32, i32, i32
  }
  func.func @transform_5(%arg0: i32, %arg1: i32) -> (i32, i32, i32) {
    %c0_i32 = arith.constant 0 : i32
    %c0_i32_0 = arith.constant 0 : i32
    %c0_i32_1 = arith.constant 0 : i32
    return %arg0, %c0_i32, %c0_i32_0 : i32, i32, i32
  }
  func.func @transform_6(%arg0: i32, %arg1: i32) -> (i32, i32, i32) {
    %c0_i32 = arith.constant 0 : i32
    %c0_i32_0 = arith.constant 0 : i32
    %c0_i32_1 = arith.constant 0 : i32
    return %arg0, %c0_i32, %c0_i32_0 : i32, i32, i32
  }
}

</mosaic_0001>

<llo_original>
// kernel: lstm_model_forward.2
$region0: #{lstm_model_forward.2}
  #allocation0 [shape = 'u32[]', space=smem, size = 0x4, offset = 0x4, fixed_abs, tag = 'smem constant byte address 0x4 - core index']
  #allocation1 [shape = 'u32[144,128]{1,0:T(1,128)}', space=vmem, size = 0x12000, scoped, tag = 'internal scratch']
  #allocation2 [shape = 'f32[32,128]{1,0:T(8,128)}', space=vmem, size = 0x4000, scoped, tag = 'scratch operand']
  #allocation3 [shape = 'f32[8,32]{1,0:T(8,128)}', space=vmem, size = 0x1000, scoped, tag = 'scratch operand']
  #allocation4 [shape = 'f32[8,32]{1,0:T(8,128)}', space=vmem, size = 0x1000, scoped, tag = 'scratch operand']
  %s0 = inlined_call_operand.vmem [shape: bf16[1,64,4], index: 0, kind: input, shape index: {}]
  %s1 = inlined_call_operand.vmem [shape: bf16[4,128], index: 1, kind: input, shape index: {}]
  %s2 = inlined_call_operand.vmem [shape: bf16[32,128], index: 2, kind: input, shape index: {}]
  %s3 = inlined_call_operand.vmem [shape: f32[1,128], index: 3, kind: input, shape index: {}]
  %s4 = inlined_call_operand.vmem [shape: bf16[1,64,32], index: 4, kind: output, shape index: {0}]
  %s5 = inlined_call_operand.vmem [shape: f32[1,8,32], index: 5, kind: output, shape index: {1}]
  %s6 = inlined_call_operand.vmem [shape: f32[1,8,32], index: 6, kind: output, shape index: {2}]
  %7 = xla_tuple %s4, %s5, %s6
  %s8 = sld [smem:[#allocation0]]
  $region73: #{lstm_model_forward.2} parent=0
    _
  %s10 = ssub.s32 1, %s8
  %s11 = scalar_select 0, %s10, %s8
  loop: start=0, step=1, limit=4
  $region2: #{lstm_model_forward.2} parent=0 // loop_pre_header
    _
  $region3: #{lstm_model_forward.2} parent=0 // loop_header
    %s13 = sphi 0, %s17
    %p14 = scmp.ge.s32.totalorder %s13, 4
    %s20 = sphi 0, %s32
    %s21 = sphi 0, %s28
    %s22 = sphi 0, %s20
    %s23 = sphi 0, %s21
    %s24 = sphi 0, %s22
    %s25 = sphi 0, %s23
    %s37 = sphi 0, %s39
    %s40 = sphi 0, %s37
    %s41 = sphi 0, %s40
    %s57 = sphi 0, %s41
    %s61 = sphi 0, %s61
    %s63 = sphi 0, %s61
    %s64 = sphi 0, %s63
    %s78 = sphi 0, %s64
    %s82 = sphi 0, %s82
    %s84 = sphi 0, %s82
    %s85 = sphi 0, %s84
    %s99 = sphi 0, %s85
    %s103 = sphi 0, %s103
    %s105 = sphi 0, %s103
    %s106 = sphi 0, %s105
    %s120 = sphi 0, %s106
    %s128 = sphi 0, %s130
    %s131 = sphi 0, %s128
    %s132 = sphi 0, %s131
    %s148 = sphi 0, %s132
    %s154 = sphi 0, %s156
    %s157 = sphi 0, %s154
    %s158 = sphi 0, %s157
    %s174 = sphi 0, %s158
    %s180 = sphi 0, %s182
    %s183 = sphi 0, %s180
    %s184 = sphi 0, %s183
    %s200 = sphi 0, %s184
  $region4: #{lstm_model_forward.2} parent=0 // loop_header_branch
    %16 = sbr.rel (%p14) target = $region8
  $region5: #{lstm_model_forward.2} parent=0 // loop_body
    %s18 = ssub.s32 %s13, 1
    %s19 = ssub.s32 %s13, 2
    %s26 = sadd.s32 1, %s21
    %p27 = scmp.ge.s32.totalorder %s26, 2
    %s28 = scalar_select %p27, 0, %s26
    %s29 = sadd.s32 1, %s20
    %s30 = scalar_select %p27, %s29, %s20
    %p31 = scmp.ge.s32.totalorder %s30, 1
    %s32 = scalar_select %p31, 0, %s30
    %s33 = ssub.s32 %s20, %s32
    %s34 = ssub.s32 %s21, %s28
    %s35 = sor.u32 %s33, %s34
    %p36 = scmp.eq.s32.totalorder %s35, 0
    %s38 = sadd.s32 %s37, 1
    %s39 = scalar_select %p36, %s37, %s38
    %p42 = pneg %p36
    %p43 = scmp.eq.s32.totalorder %s13, 1
    %p44 = por %p42, %p43
    %p45 = scmp.ne.s32.totalorder %s37, %s40
    %p46 = scmp.eq.s32.totalorder %s13, 0
    %p47 = por %p45, %p46
    %p48 = scmp.ne.s32.totalorder %s37, %s40
    %p49 = scmp.eq.s32.totalorder %s18, 1
    %p50 = por %p48, %p49
    %p51 = scmp.ne.s32.totalorder %s40, %s41
    %p52 = scmp.eq.s32.totalorder %s18, 0
    %p53 = por %p51, %p52
    %p54 = scmp.ne.s32.totalorder %s40, %s41
    %p55 = scmp.eq.s32.totalorder %s19, 1
    %p56 = por %p54, %p55
    %p58 = scmp.ne.s32.totalorder %s41, %s57
    %p59 = scmp.eq.s32.totalorder %s19, 0
    %p60 = por %p58, %p59
    %s62 = sadd.s32 %s61, 1
    %p65 = scmp.eq.s32.totalorder %s13, 1
    %p66 = scmp.ne.s32.totalorder %s61, %s63
    %p67 = scmp.eq.s32.totalorder %s13, 0
    %p68 = por %p66, %p67
    %p69 = scmp.ne.s32.totalorder %s61, %s63
    %p70 = scmp.eq.s32.totalorder %s18, 1
    %p71 = por %p69, %p70
    %p72 = scmp.ne.s32.totalorder %s63, %s64
    %p73 = scmp.eq.s32.totalorder %s18, 0
    %p74 = por %p72, %p73
    %p75 = scmp.ne.s32.totalorder %s63, %s64
    %p76 = scmp.eq.s32.totalorder %s19, 1
    %p77 = por %p75, %p76
    %p79 = scmp.ne.s32.totalorder %s64, %s78
    %p80 = scmp.eq.s32.totalorder %s19, 0
    %p81 = por %p79, %p80
    %s83 = sadd.s32 %s82, 1
    %p86 = scmp.eq.s32.totalorder %s13, 1
    %p87 = scmp.ne.s32.totalorder %s82, %s84
    %p88 = scmp.eq.s32.totalorder %s13, 0
    %p89 = por %p87, %p88
    %p90 = scmp.ne.s32.totalorder %s82, %s84
    %p91 = scmp.eq.s32.totalorder %s18, 1
    %p92 = por %p90, %p91
    %p93 = scmp.ne.s32.totalorder %s84, %s85
    %p94 = scmp.eq.s32.totalorder %s18, 0
    %p95 = por %p93, %p94
    %p96 = scmp.ne.s32.totalorder %s84, %s85
    %p97 = scmp.eq.s32.totalorder %s19, 1
    %p98 = por %p96, %p97
    %p100 = scmp.ne.s32.totalorder %s85, %s99
    %p101 = scmp.eq.s32.totalorder %s19, 0
    %p102 = por %p100, %p101
    %s104 = sadd.s32 %s103, 1
    %p107 = scmp.eq.s32.totalorder %s13, 1
    %p108 = scmp.ne.s32.totalorder %s103, %s105
    %p109 = scmp.eq.s32.totalorder %s13, 0
    %p110 = por %p108, %p109
    %p111 = scmp.ne.s32.totalorder %s103, %s105
    %p112 = scmp.eq.s32.totalorder %s18, 1
    %p113 = por %p111, %p112
    %p114 = scmp.ne.s32.totalorder %s105, %s106
    %p115 = scmp.eq.s32.totalorder %s18, 0
    %p116 = por %p114, %p115
    %p117 = scmp.ne.s32.totalorder %s105, %s106
    %p118 = scmp.eq.s32.totalorder %s19, 1
    %p119 = por %p117, %p118
    %p121 = scmp.ne.s32.totalorder %s106, %s120
    %p122 = scmp.eq.s32.totalorder %s19, 0
    %p123 = por %p121, %p122
    %s124 = ssub.s32 %s20, %s32
    %s125 = ssub.s32 %s21, %s28
    %s126 = sor.u32 %s124, %s125
    %p127 = scmp.eq.s32.totalorder %s126, 0
    %s129 = sadd.s32 %s128, 1
    %s130 = scalar_select %p127, %s128, %s129
    %p133 = pneg %p127
    %p134 = scmp.eq.s32.totalorder %s13, 1
    %p135 = por %p133, %p134
    %p136 = scmp.ne.s32.totalorder %s128, %s131
    %p137 = scmp.eq.s32.totalorder %s13, 0
    %p138 = por %p136, %p137
    %p139 = scmp.ne.s32.totalorder %s128, %s131
    %p140 = scmp.eq.s32.totalorder %s18, 1
    %p141 = por %p139, %p140
    %p142 = scmp.ne.s32.totalorder %s131, %s132
    %p143 = scmp.eq.s32.totalorder %s18, 0
    %p144 = por %p142, %p143
    %p145 = scmp.ne.s32.totalorder %s131, %s132
    %p146 = scmp.eq.s32.totalorder %s19, 1
    %p147 = por %p145, %p146
    %p149 = scmp.ne.s32.totalorder %s132, %s148
    %p150 = scmp.eq.s32.totalorder %s19, 0
    %p151 = por %p149, %p150
    %s152 = ssub.s32 %s20, %s32
    %p153 = scmp.eq.s32.totalorder %s152, 0
    %s155 = sadd.s32 %s154, 1
    %s156 = scalar_select %p153, %s154, %s155
    %p159 = pneg %p153
    %p160 = scmp.eq.s32.totalorder %s13, 1
    %p161 = por %p159, %p160
    %p162 = scmp.ne.s32.totalorder %s154, %s157
    %p163 = scmp.eq.s32.totalorder %s13, 0
    %p164 = por %p162, %p163
    %p165 = scmp.ne.s32.totalorder %s154, %s157
    %p166 = scmp.eq.s32.totalorder %s18, 1
    %p167 = por %p165, %p166
    %p168 = scmp.ne.s32.totalorder %s157, %s158
    %p169 = scmp.eq.s32.totalorder %s18, 0
    %p170 = por %p168, %p169
    %p171 = scmp.ne.s32.totalorder %s157, %s158
    %p172 = scmp.eq.s32.totalorder %s19, 1
    %p173 = por %p171, %p172
    %p175 = scmp.ne.s32.totalorder %s158, %s174
    %p176 = scmp.eq.s32.totalorder %s19, 0
    %p177 = por %p175, %p176
    %s178 = ssub.s32 %s20, %s32
    %p179 = scmp.eq.s32.totalorder %s178, 0
    %s181 = sadd.s32 %s180, 1
    %s182 = scalar_select %p179, %s180, %s181
    %p185 = pneg %p179
    %p186 = scmp.eq.s32.totalorder %s13, 1
    %p187 = por %p185, %p186
    %p188 = scmp.ne.s32.totalorder %s180, %s183
    %p189 = scmp.eq.s32.totalorder %s13, 0
    %p190 = por %p188, %p189
    %p191 = scmp.ne.s32.totalorder %s180, %s183
    %p192 = scmp.eq.s32.totalorder %s18, 1
    %p193 = por %p191, %p192
    %p194 = scmp.ne.s32.totalorder %s183, %s184
    %p195 = scmp.eq.s32.totalorder %s18, 0
    %p196 = por %p194, %p195
    %p197 = scmp.ne.s32.totalorder %s183, %s184
    %p198 = scmp.eq.s32.totalorder %s19, 1
    %p199 = por %p197, %p198
    %p201 = scmp.ne.s32.totalorder %s184, %s200
    %p202 = scmp.eq.s32.totalorder %s19, 0
    %p203 = por %p201, %p202
    %p204 = scmp.le.s32.totalorder 1, %s13
    %p205 = scmp.lt.s32.totalorder %s13, 3
    %p206 = pnand %p204, %p205
    %p207 = pneg %p206
    // Predicated region
    $region9: #{lstm_model_forward.2} parent=5 // pred_check
      _
    $region10: #{lstm_model_forward.2} parent=5 // pred_check_branch
      %209 = sbr.rel (%p206) target = $region12
    $region11: #{lstm_model_forward.2} parent=5 // pred_region
      %s210 = ssub.s32 %s13, 1
      // Predicated region
      $region13: #{lstm_model_forward.2} parent=11 // pred_check
        %p211 = pneg %p74
      $region14: #{lstm_model_forward.2} parent=11 // pred_check_branch
        %213 = sbr.rel (%p211) target = $region16
      $region15: #{lstm_model_forward.2} parent=11 // pred_region
        _
      $region16: #{lstm_model_forward.2} parent=11 // pred_fallthru
        _
      // Predicated region
      $region17: #{lstm_model_forward.2} parent=11 // pred_check
        %p214 = pneg %p95
      $region18: #{lstm_model_forward.2} parent=11 // pred_check_branch
        %216 = sbr.rel (%p214) target = $region20
      $region19: #{lstm_model_forward.2} parent=11 // pred_region
        _
      $region20: #{lstm_model_forward.2} parent=11 // pred_fallthru
        _
      // Predicated region
      $region21: #{lstm_model_forward.2} parent=11 // pred_check
        %p217 = pneg %p116
      $region22: #{lstm_model_forward.2} parent=11 // pred_check_branch
        %219 = sbr.rel (%p217) target = $region24
      $region23: #{lstm_model_forward.2} parent=11 // pred_region
        _
      $region24: #{lstm_model_forward.2} parent=11 // pred_fallthru
        _
    $region12: #{lstm_model_forward.2} parent=5 // pred_fallthru
      _
    %p220 = scmp.lt.s32.totalorder %s13, 2
    // Predicated region
    $region25: #{lstm_model_forward.2} parent=5 // pred_check
      %p221 = pneg %p220
    $region26: #{lstm_model_forward.2} parent=5 // pred_check_branch
      %223 = sbr.rel (%p221) target = $region28
    $region27: #{lstm_model_forward.2} parent=5 // pred_region
      // Predicated region
      $region29: #{lstm_model_forward.2} parent=27 // pred_check
        %p224 = pneg %p47
      $region30: #{lstm_model_forward.2} parent=27 // pred_check_branch
        %226 = sbr.rel (%p224) target = $region32
      $region31: #{lstm_model_forward.2} parent=27 // pred_region
        %s227 = smul.u32 4, %s21
        %p228 = scmp.lt.s32.totalorder %s20, 0
        %s229 = scalar_select %p228, %s20, 0
        %p230 = scmp.lt.s32.totalorder %s227, 7
        %s231 = scalar_select %p230, %s227, 7
        %s232 = smul.addr %s229, 8
        %s233 = sadd.s32 %s231, %s232
        %s234 = smul.addr %s233, 4
        %s235 = scalar_lea.vmem %s0, %s234
        %s236 = smul.u32 4, %s21
      $region32: #{lstm_model_forward.2} parent=27 // pred_fallthru
        _
    $region28: #{lstm_model_forward.2} parent=5 // pred_fallthru
      _
    %p237 = scmp.le.s32.totalorder 1, %s13
    %p238 = scmp.lt.s32.totalorder %s13, 3
    %p239 = pnand %p237, %p238
    %p240 = pneg %p239
    // Predicated region
    $region33: #{lstm_model_forward.2} parent=5 // pred_check
      _
    $region34: #{lstm_model_forward.2} parent=5 // pred_check_branch
      %242 = sbr.rel (%p239) target = $region36
    $region35: #{lstm_model_forward.2} parent=5 // pred_region
      %s243 = ssub.s32 %s13, 1
      %s244 = smul.u32 4, %s23
      %p245 = scmp.lt.s32.totalorder %s22, 0
      %s246 = scalar_select %p245, %s22, 0
      %p247 = scmp.lt.s32.totalorder %s244, 7
      %s248 = scalar_select %p247, %s244, 7
      %s249 = smul.addr %s246, 8
      %s250 = sadd.s32 %s248, %s249
      %s251 = smul.addr %s250, 4
      %s252 = scalar_lea.vmem %s0, %s251
      %p253 = pneg %p53
      %p254 = pneg %p50
      %p255 = pneg %p74
      %p256 = pneg %p71
      %p257 = pneg %p95
      %p258 = pneg %p92
      %p259 = pneg %p116
      %p260 = pneg %p113
      %p261 = pneg %p144
      %p262 = pneg %p141
      %s263 = smul.u32 4, %s23
      %p264 = scmp.lt.s32.totalorder %s22, 0
      %s265 = scalar_select %p264, %s22, 0
      %p266 = scmp.lt.s32.totalorder %s263, 7
      %s267 = scalar_select %p266, %s263, 7
      %s268 = smul.addr %s265, 8
      %s269 = sadd.s32 %s267, %s268
      %s270 = smul.addr %s269, 4
      %s271 = scalar_lea.vmem %s4, %s270
      %p272 = pneg %p170
      %p273 = pneg %p167
      %p274 = scmp.lt.s32.totalorder %s22, 0
      %s275 = scalar_select %p274, %s22, 0
      %s276 = smul.addr %s275, 8
      %s277 = scalar_lea.vmem %s5, %s276
      %p278 = pneg %p196
      %p279 = pneg %p193
      %p280 = scmp.lt.s32.totalorder %s22, 0
      %s281 = scalar_select %p280, %s22, 0
      %s282 = smul.addr %s281, 8
      %s283 = scalar_lea.vmem %s6, %s282
      %s284 = smul.u32 4, %s23
      %p285 = scmp.lt.s32.totalorder %s22, 0
      %s286 = scalar_select %p285, %s22, 0
      %p287 = scmp.lt.s32.totalorder %s284, 7
      %s288 = scalar_select %p287, %s284, 7
      %s289 = smul.addr %s286, 8
      %s290 = sadd.s32 %s288, %s289
      %s291 = smul.addr %s290, 4
      %s292 = scalar_lea.vmem %s0, %s291
      %s293 = smul.u32 4, %s23
      %s294 = smul.u32 4, %s23
      %p295 = scmp.lt.s32.totalorder %s22, 0
      %s296 = scalar_select %p295, %s22, 0
      %p297 = scmp.lt.s32.totalorder %s294, 7
      %s298 = scalar_select %p297, %s294, 7
      %s299 = smul.addr %s296, 8
      %s300 = sadd.s32 %s298, %s299
      %s301 = smul.addr %s300, 4
      %s302 = scalar_lea.vmem %s4, %s301
      %s303 = smul.u32 4, %s23
      %p304 = scmp.lt.s32.totalorder %s22, 0
      %s305 = scalar_select %p304, %s22, 0
      %s306 = smul.addr %s305, 8
      %s307 = scalar_lea.vmem %s5, %s306
      %p308 = scmp.lt.s32.totalorder %s22, 0
      %s309 = scalar_select %p308, %s22, 0
      %s310 = smul.addr %s309, 8
      %s311 = scalar_lea.vmem %s6, %s310
      %p313 = scmp.eq.s32.totalorder %s23, 0
      // Predicated region
      $region37: #{lstm_model_forward.2} parent=35 // pred_check
        %p314 = pneg %p313
      $region38: #{lstm_model_forward.2} parent=35 // pred_check_branch
        %316 = sbr.rel (%p314) target = $region40
      $region39: #{lstm_model_forward.2} parent=35 // pred_region
        %vm317 = vcmask 261120
        %318 = vst.msk [vmem:[#allocation3] sm:$0xff] %vm317, 0.0
        %319 = vst.msk [vmem:[#allocation4] sm:$0xff] %vm317, 0.0
      $region40: #{lstm_model_forward.2} parent=35 // pred_fallthru
        _
      %v320 = vld [vmem:[%s292] sm:$0xf]
      %v321 = vld [vmem:[%s292 + $0x4] sm:$0xf]
      %v322 = vld [vmem:[%s292 + $0x8] sm:$0xf]
      %v323 = vld [vmem:[%s292 + $0xc] sm:$0xf]
      %v324 = vld [vmem:[%s1] sm:$0x3]
      %v325 = vld [vmem:[%s3] sm:$0x1]
      %v327 = vlaneseq
      %v328 = vshrl.u32 %v327, 7
      %v329 = vsub.s32 0, %v328
      %v330 = vrot.slane %v325, %v329
      %v336 = vunpack.c.l.b16 %v320
      %v337 = vunpack.c.l.b16 %v321
      %v338 = vunpack.c.l.b16 %v322
      %v339 = vunpack.c.l.b16 %v323
      %v340 = vpack.c.b16 %v337, %v336
      %v341 = vpack.c.b16 %v339, %v338
      %vm342 = vcmask 31744
      %v344 = vsel %vm342, %v340, 0
      %v347 = vsel %vm342, %v341, 0
      %vm349 = vcmask 1041408
      %v351 = vsel %vm349, %v324, 0
      %353 = vmatprep.subr.bf16.mxu0 0
      %354 = vmatpush1.bf16.msra.mxu0 %v351
      %355 = vmatprep.subr.bf16.mxu0 0
      %356 = vmatpush1.bf16.msra.mxu0 0
      %357 = vmatprep.subr.bf16.mxu0 0
      %358 = vmatpush1.bf16.msra.mxu0 0
      %359 = vmatprep.subr.bf16.mxu0 0
      %360 = vmatpush1.bf16.msra.mxu0 0
      %361 = vmatprep.subr.bf16.mxu0 0
      %362 = vmatpush1.bf16.msra.mxu0 0
      %363 = vmatprep.subr.bf16.mxu0 0
      %364 = vmatpush1.bf16.msra.mxu0 0
      %365 = vmatprep.subr.bf16.mxu0 0
      %366 = vmatpush1.bf16.msra.mxu0 0
      %367 = vmatprep.subr.bf16.mxu0 0
      %368 = vmatpush1.bf16.msra.mxu0 0
      %369 = vmatprep.subr.bf16.mxu0 0
      %370 = vmatpush1.bf16.msra.mxu0 0
      %371 = vmatprep.subr.bf16.mxu0 0
      %372 = vmatpush1.bf16.msra.mxu0 0
      %373 = vmatprep.subr.bf16.mxu0 0
      %374 = vmatpush1.bf16.msra.mxu0 0
      %375 = vmatprep.subr.bf16.mxu0 0
      %376 = vmatpush1.bf16.msra.mxu0 0
      %377 = vmatprep.subr.bf16.mxu0 0
      %378 = vmatpush1.bf16.msra.mxu0 0
      %379 = vmatprep.subr.bf16.mxu0 0
      %380 = vmatpush1.bf16.msra.mxu0 0
      %381 = vmatprep.subr.bf16.mxu0 0
      %382 = vmatpush1.bf16.msra.mxu0 0
      %383 = vmatprep.subr.bf16.mxu0 0
      %384 = vmatpush1.bf16.msra.mxu0 0
      %385 = vmatprep.mubr.bf16.mxu0 0
      %386 = vmatmul.mubr.bf16.gmra.mrb[0].mxu0 %v344
      %v387 = vpop.f32.mrb[0].mxu0
      %v388 = vadd.f32 %v330, %v387
      %v389 = vpop.f32.mrb[0].mxu0
      %v390 = vpop.f32.mrb[0].mxu0
      %v391 = vadd.f32 %v330, %v390
      %v392 = vpop.f32.mrb[0].mxu0
      %393 = vmatprep.mubr.bf16.mxu0 0
      %394 = vmatmul.mubr.bf16.gmra.mrb[0].mxu0 %v347
      %v395 = vpop.f32.mrb[0].mxu0
      %v396 = vadd.f32 %v330, %v395
      %v397 = vpop.f32.mrb[0].mxu0
      %v398 = vpop.f32.mrb[0].mxu0
      %v399 = vadd.f32 %v330, %v398
      %v400 = vpop.f32.mrb[0].mxu0
      %401 = vdwg.mxu0
      %402 = vst [vmem:[#allocation2] sm:$0xff] %v388
      %403 = vst [vmem:[#allocation2 + $0x8] sm:$0xff] %v391
      %404 = vst [vmem:[#allocation2 + $0x10] sm:$0xff] %v396
      %405 = vst [vmem:[#allocation2 + $0x18] sm:$0xff] %v399
      %v406 = vld [vmem:[%s2] sm:$0xf]
      %v407 = vld [vmem:[%s2 + $0x4] sm:$0xf]
      %v408 = vld [vmem:[%s2 + $0x8] sm:$0xf]
      %v409 = vld [vmem:[%s2 + $0xc] sm:$0xf]
      %v410 = vld [vmem:[#allocation3] sm:$0xff]
      %v411 = vld [vmem:[#allocation4] sm:$0xff]
      %v412 = vld [vmem:[#allocation2] sm:$0xff]
      %v413 = vpack.c.bf16 %v410, %v410
      %v418 = vunpack.c.l.b16 %v406
      %v419 = vunpack.c.l.b16 %v407
      %v420 = vunpack.c.l.b16 %v408
      %v421 = vunpack.c.l.b16 %v409
      %v422 = vpack.c.b16 %v419, %v418
      %v423 = vpack.c.b16 %v421, %v420
      %vm426 = vcmask 261120
      %v428 = vsel %vm426, %v413, 0
      %430 = vmatprep.subr.bf16.mxu0 0
      %431 = vmatpush1.bf16.msra.mxu0 %v422
      %432 = vmatprep.subr.bf16.mxu0 0
      %433 = vmatpush1.bf16.msra.mxu0 %v423
      %434 = vmatprep.subr.bf16.mxu0 0
      %435 = vmatpush1.bf16.msra.mxu0 0
      %436 = vmatprep.subr.bf16.mxu0 0
      %437 = vmatpush1.bf16.msra.mxu0 0
      %438 = vmatprep.subr.bf16.mxu0 0
      %439 = vmatpush1.bf16.msra.mxu0 0
      %440 = vmatprep.subr.bf16.mxu0 0
      %441 = vmatpush1.bf16.msra.mxu0 0
      %442 = vmatprep.subr.bf16.mxu0 0
      %443 = vmatpush1.bf16.msra.mxu0 0
      %444 = vmatprep.subr.bf16.mxu0 0
      %445 = vmatpush1.bf16.msra.mxu0 0
      %446 = vmatprep.subr.bf16.mxu0 0
      %447 = vmatpush1.bf16.msra.mxu0 0
      %448 = vmatprep.subr.bf16.mxu0 0
      %449 = vmatpush1.bf16.msra.mxu0 0
      %450 = vmatprep.subr.bf16.mxu0 0
      %451 = vmatpush1.bf16.msra.mxu0 0
      %452 = vmatprep.subr.bf16.mxu0 0
      %453 = vmatpush1.bf16.msra.mxu0 0
      %454 = vmatprep.subr.bf16.mxu0 0
      %455 = vmatpush1.bf16.msra.mxu0 0
      %456 = vmatprep.subr.bf16.mxu0 0
      %457 = vmatpush1.bf16.msra.mxu0 0
      %458 = vmatprep.subr.bf16.mxu0 0
      %459 = vmatpush1.bf16.msra.mxu0 0
      %460 = vmatprep.subr.bf16.mxu0 0
      %461 = vmatpush1.bf16.msra.mxu0 0
      %462 = vmatprep.mubr.bf16.mxu0 0
      %463 = vmatmul.mubr.bf16.gmra.mrb[0].mxu0 %v428
      %v464 = vpop.f32.mrb[0].mxu0
      %v465 = vadd.f32 0.0, %v464
      %v466 = vpop.f32.mrb[0].mxu0
      %v467 = vpop.f32.mrb[0].mxu0
      %v468 = vpop.f32.mrb[0].mxu0
      %469 = vdwg.mxu0
      %v470 = vadd.f32 %v412, %v465
      %v471 = vxor.u32 %v470, 2147483648
      %v472 = vmul.f32 %v471, 1.442695
      %v473 = vpow.pop %v472
      %v474 = vadd.f32 %v473, 1.0
      %v475 = vrcp.pop %v474
      %v476 = vmul.f32 1.0, %v475
      %v477 = vtanh.pop %v470
      %479 = vrot.lane.b32.xlu0 %v411, 32
      %v480 = vpop.permute.xlu0 %479
      %v482 = vmul.f32 %v476, %v480
      %484 = vrot.lane.b32.xlu0 %v477, 64
      %v485 = vpop.permute.xlu0 %484
      %v487 = vmul.f32 %v476, %v485
      %489 = vrot.lane.b32.xlu0 %v487, 32
      %v490 = vpop.permute.xlu0 %489
      %v492 = vadd.f32 %v482, %v490
      %v493 = vtanh.pop %v492
      %495 = vrot.lane.b32.xlu0 %v493, 64
      %v496 = vpop.permute.xlu0 %495
      %v498 = vmul.f32 %v476, %v496
      %500 = vrot.lane.b32.xlu0 %v498, 32
      %v501 = vpop.permute.xlu0 %500
      %503 = vst.msk [vmem:[#allocation3] sm:$0xff] %vm426, %v501
      %505 = vrot.lane.b32.xlu0 %v492, 96
      %v506 = vpop.permute.xlu0 %505
      %508 = vst.msk [vmem:[#allocation4] sm:$0xff] %vm426, %v506
      %v509 = vpack.c.bf16 %v498, %v498
      %v511 = vunpack.c.l.b16 %v509
      %v512 = vpack.c.b16 %v511, %v511
      %513 = vrot.lane.b32.xlu0 %v512, 32
      %v514 = vpop.permute.xlu0 %513
      %vm516 = vcmask 257024
      %517 = vst.msk [vmem:[%s302] sm:$0xf] %vm516, %v514
      %v518 = vld [vmem:[#allocation3] sm:$0xff]
      %v519 = vld [vmem:[#allocation4] sm:$0xff]
      %v520 = vld [vmem:[#allocation2 + $0x8] sm:$0xff]
      %v521 = vpack.c.bf16 %v518, %v518
      %v523 = vsel %vm426, %v521, 0
      %525 = vmatprep.subr.bf16.mxu0 0
      %526 = vmatpush1.bf16.msra.mxu0 %v422
      %527 = vmatprep.subr.bf16.mxu0 0
      %528 = vmatpush1.bf16.msra.mxu0 %v423
      %529 = vmatprep.subr.bf16.mxu0 0
      %530 = vmatpush1.bf16.msra.mxu0 0
      %531 = vmatprep.subr.bf16.mxu0 0
      %532 = vmatpush1.bf16.msra.mxu0 0
      %533 = vmatprep.subr.bf16.mxu0 0
      %534 = vmatpush1.bf16.msra.mxu0 0
      %535 = vmatprep.subr.bf16.mxu0 0
      %536 = vmatpush1.bf16.msra.mxu0 0
      %537 = vmatprep.subr.bf16.mxu0 0
      %538 = vmatpush1.bf16.msra.mxu0 0
      %539 = vmatprep.subr.bf16.mxu0 0
      %540 = vmatpush1.bf16.msra.mxu0 0
      %541 = vmatprep.subr.bf16.mxu0 0
      %542 = vmatpush1.bf16.msra.mxu0 0
      %543 = vmatprep.subr.bf16.mxu0 0
      %544 = vmatpush1.bf16.msra.mxu0 0
      %545 = vmatprep.subr.bf16.mxu0 0
      %546 = vmatpush1.bf16.msra.mxu0 0
      %547 = vmatprep.subr.bf16.mxu0 0
      %548 = vmatpush1.bf16.msra.mxu0 0
      %549 = vmatprep.subr.bf16.mxu0 0
      %550 = vmatpush1.bf16.msra.mxu0 0
      %551 = vmatprep.subr.bf16.mxu0 0
      %552 = vmatpush1.bf16.msra.mxu0 0
      %553 = vmatprep.subr.bf16.mxu0 0
      %554 = vmatpush1.bf16.msra.mxu0 0
      %555 = vmatprep.subr.bf16.mxu0 0
      %556 = vmatpush1.bf16.msra.mxu0 0
      %557 = vmatprep.mubr.bf16.mxu0 0
      %558 = vmatmul.mubr.bf16.gmra.mrb[0].mxu0 %v523
      %v559 = vpop.f32.mrb[0].mxu0
      %v560 = vadd.f32 0.0, %v559
      %v561 = vpop.f32.mrb[0].mxu0
      %v562 = vpop.f32.mrb[0].mxu0
      %v563 = vpop.f32.mrb[0].mxu0
      %564 = vdwg.mxu0
      %v565 = vadd.f32 %v520, %v560
      %v566 = vxor.u32 %v565, 2147483648
      %v567 = vmul.f32 %v566, 1.442695
      %v568 = vpow.pop %v567
      %v569 = vadd.f32 %v568, 1.0
      %v570 = vrcp.pop %v569
      %v571 = vmul.f32 1.0, %v570
      %v572 = vtanh.pop %v565
      %574 = vrot.lane.b32.xlu0 %v519, 32
      %v575 = vpop.permute.xlu0 %574
      %v577 = vmul.f32 %v571, %v575
      %579 = vrot.lane.b32.xlu0 %v572, 64
      %v580 = vpop.permute.xlu0 %579
      %v582 = vmul.f32 %v571, %v580
      %584 = vrot.lane.b32.xlu0 %v582, 32
      %v585 = vpop.permute.xlu0 %584
      %v587 = vadd.f32 %v577, %v585
      %v588 = vtanh.pop %v587
      %590 = vrot.lane.b32.xlu0 %v588, 64
      %v591 = vpop.permute.xlu0 %590
      %v593 = vmul.f32 %v571, %v591
      %595 = vrot.lane.b32.xlu0 %v593, 32
      %v596 = vpop.permute.xlu0 %595
      %598 = vst.msk [vmem:[#allocation3] sm:$0xff] %vm426, %v596
      %600 = vrot.lane.b32.xlu0 %v587, 96
      %v601 = vpop.permute.xlu0 %600
      %603 = vst.msk [vmem:[#allocation4] sm:$0xff] %vm426, %v601
      %v604 = vpack.c.bf16 %v593, %v593
      %v606 = vunpack.c.l.b16 %v604
      %v607 = vpack.c.b16 %v606, %v606
      %608 = vrot.lane.b32.xlu0 %v607, 32
      %v609 = vpop.permute.xlu0 %608
      %611 = vst.msk [vmem:[%s302 + $0x4] sm:$0xf] %vm516, %v609
      %v612 = vld [vmem:[#allocation3] sm:$0xff]
      %v613 = vld [vmem:[#allocation4] sm:$0xff]
      %v614 = vld [vmem:[#allocation2 + $0x10] sm:$0xff]
      %v615 = vpack.c.bf16 %v612, %v612
      %v617 = vsel %vm426, %v615, 0
      %619 = vmatprep.subr.bf16.mxu0 0
      %620 = vmatpush1.bf16.msra.mxu0 %v422
      %621 = vmatprep.subr.bf16.mxu0 0
      %622 = vmatpush1.bf16.msra.mxu0 %v423
      %623 = vmatprep.subr.bf16.mxu0 0
      %624 = vmatpush1.bf16.msra.mxu0 0
      %625 = vmatprep.subr.bf16.mxu0 0
      %626 = vmatpush1.bf16.msra.mxu0 0
      %627 = vmatprep.subr.bf16.mxu0 0
      %628 = vmatpush1.bf16.msra.mxu0 0
      %629 = vmatprep.subr.bf16.mxu0 0
      %630 = vmatpush1.bf16.msra.mxu0 0
      %631 = vmatprep.subr.bf16.mxu0 0
      %632 = vmatpush1.bf16.msra.mxu0 0
      %633 = vmatprep.subr.bf16.mxu0 0
      %634 = vmatpush1.bf16.msra.mxu0 0
      %635 = vmatprep.subr.bf16.mxu0 0
      %636 = vmatpush1.bf16.msra.mxu0 0
      %637 = vmatprep.subr.bf16.mxu0 0
      %638 = vmatpush1.bf16.msra.mxu0 0
      %639 = vmatprep.subr.bf16.mxu0 0
      %640 = vmatpush1.bf16.msra.mxu0 0
      %641 = vmatprep.subr.bf16.mxu0 0
      %642 = vmatpush1.bf16.msra.mxu0 0
      %643 = vmatprep.subr.bf16.mxu0 0
      %644 = vmatpush1.bf16.msra.mxu0 0
      %645 = vmatprep.subr.bf16.mxu0 0
      %646 = vmatpush1.bf16.msra.mxu0 0
      %647 = vmatprep.subr.bf16.mxu0 0
      %648 = vmatpush1.bf16.msra.mxu0 0
      %649 = vmatprep.subr.bf16.mxu0 0
      %650 = vmatpush1.bf16.msra.mxu0 0
      %651 = vmatprep.mubr.bf16.mxu0 0
      %652 = vmatmul.mubr.bf16.gmra.mrb[0].mxu0 %v617
      %v653 = vpop.f32.mrb[0].mxu0
      %v654 = vadd.f32 0.0, %v653
      %v655 = vpop.f32.mrb[0].mxu0
      %v656 = vpop.f32.mrb[0].mxu0
      %v657 = vpop.f32.mrb[0].mxu0
      %658 = vdwg.mxu0
      %v659 = vadd.f32 %v614, %v654
      %v660 = vxor.u32 %v659, 2147483648
      %v661 = vmul.f32 %v660, 1.442695
      %v662 = vpow.pop %v661
      %v663 = vadd.f32 %v662, 1.0
      %v664 = vrcp.pop %v663
      %v665 = vmul.f32 1.0, %v664
      %v666 = vtanh.pop %v659
      %668 = vrot.lane.b32.xlu0 %v613, 32
      %v669 = vpop.permute.xlu0 %668
      %v671 = vmul.f32 %v665, %v669
      %673 = vrot.lane.b32.xlu0 %v666, 64
      %v674 = vpop.permute.xlu0 %673
      %v676 = vmul.f32 %v665, %v674
      %678 = vrot.lane.b32.xlu0 %v676, 32
      %v679 = vpop.permute.xlu0 %678
      %v681 = vadd.f32 %v671, %v679
      %v682 = vtanh.pop %v681
      %684 = vrot.lane.b32.xlu0 %v682, 64
      %v685 = vpop.permute.xlu0 %684
      %v687 = vmul.f32 %v665, %v685
      %689 = vrot.lane.b32.xlu0 %v687, 32
      %v690 = vpop.permute.xlu0 %689
      %692 = vst.msk [vmem:[#allocation3] sm:$0xff] %vm426, %v690
      %694 = vrot.lane.b32.xlu0 %v681, 96
      %v695 = vpop.permute.xlu0 %694
      %697 = vst.msk [vmem:[#allocation4] sm:$0xff] %vm426, %v695
      %v698 = vpack.c.bf16 %v687, %v687
      %v700 = vunpack.c.l.b16 %v698
      %v701 = vpack.c.b16 %v700, %v700
      %702 = vrot.lane.b32.xlu0 %v701, 32
      %v703 = vpop.permute.xlu0 %702
      %705 = vst.msk [vmem:[%s302 + $0x8] sm:$0xf] %vm516, %v703
      %v706 = vld [vmem:[#allocation3] sm:$0xff]
      %v707 = vld [vmem:[#allocation4] sm:$0xff]
      %v708 = vld [vmem:[#allocation2 + $0x18] sm:$0xff]
      %v709 = vpack.c.bf16 %v706, %v706
      %v711 = vsel %vm426, %v709, 0
      %713 = vmatprep.subr.bf16.mxu0 0
      %714 = vmatpush1.bf16.msra.mxu0 %v422
      %715 = vmatprep.subr.bf16.mxu0 0
      %716 = vmatpush1.bf16.msra.mxu0 %v423
      %717 = vmatprep.subr.bf16.mxu0 0
      %718 = vmatpush1.bf16.msra.mxu0 0
      %719 = vmatprep.subr.bf16.mxu0 0
      %720 = vmatpush1.bf16.msra.mxu0 0
      %721 = vmatprep.subr.bf16.mxu0 0
      %722 = vmatpush1.bf16.msra.mxu0 0
      %723 = vmatprep.subr.bf16.mxu0 0
      %724 = vmatpush1.bf16.msra.mxu0 0
      %725 = vmatprep.subr.bf16.mxu0 0
      %726 = vmatpush1.bf16.msra.mxu0 0
      %727 = vmatprep.subr.bf16.mxu0 0
      %728 = vmatpush1.bf16.msra.mxu0 0
      %729 = vmatprep.subr.bf16.mxu0 0
      %730 = vmatpush1.bf16.msra.mxu0 0
      %731 = vmatprep.subr.bf16.mxu0 0
      %732 = vmatpush1.bf16.msra.mxu0 0
      %733 = vmatprep.subr.bf16.mxu0 0
      %734 = vmatpush1.bf16.msra.mxu0 0
      %735 = vmatprep.subr.bf16.mxu0 0
      %736 = vmatpush1.bf16.msra.mxu0 0
      %737 = vmatprep.subr.bf16.mxu0 0
      %738 = vmatpush1.bf16.msra.mxu0 0
      %739 = vmatprep.subr.bf16.mxu0 0
      %740 = vmatpush1.bf16.msra.mxu0 0
      %741 = vmatprep.subr.bf16.mxu0 0
      %742 = vmatpush1.bf16.msra.mxu0 0
      %743 = vmatprep.subr.bf16.mxu0 0
      %744 = vmatpush1.bf16.msra.mxu0 0
      %745 = vmatprep.mubr.bf16.mxu0 0
      %746 = vmatmul.mubr.bf16.gmra.mrb[0].mxu0 %v711
      %v747 = vpop.f32.mrb[0].mxu0
      %v748 = vadd.f32 0.0, %v747
      %v749 = vpop.f32.mrb[0].mxu0
      %v750 = vpop.f32.mrb[0].mxu0
      %v751 = vpop.f32.mrb[0].mxu0
      %752 = vdwg.mxu0
      %v753 = vadd.f32 %v708, %v748
      %v754 = vxor.u32 %v753, 2147483648
      %v755 = vmul.f32 %v754, 1.442695
      %v756 = vpow.pop %v755
      %v757 = vadd.f32 %v756, 1.0
      %v758 = vrcp.pop %v757
      %v759 = vmul.f32 1.0, %v758
      %v760 = vtanh.pop %v753
      %762 = vrot.lane.b32.xlu0 %v707, 32
      %v763 = vpop.permute.xlu0 %762
      %v765 = vmul.f32 %v759, %v763
      %767 = vrot.lane.b32.xlu0 %v760, 64
      %v768 = vpop.permute.xlu0 %767
      %v770 = vmul.f32 %v759, %v768
      %772 = vrot.lane.b32.xlu0 %v770, 32
      %v773 = vpop.permute.xlu0 %772
      %v775 = vadd.f32 %v765, %v773
      %v776 = vtanh.pop %v775
      %778 = vrot.lane.b32.xlu0 %v776, 64
      %v779 = vpop.permute.xlu0 %778
      %v781 = vmul.f32 %v759, %v779
      %783 = vrot.lane.b32.xlu0 %v781, 32
      %v784 = vpop.permute.xlu0 %783
      %786 = vst.msk [vmem:[#allocation3] sm:$0xff] %vm426, %v784
      %788 = vrot.lane.b32.xlu0 %v775, 96
      %v789 = vpop.permute.xlu0 %788
      %791 = vst.msk [vmem:[#allocation4] sm:$0xff] %vm426, %v789
      %v792 = vpack.c.bf16 %v781, %v781
      %v794 = vunpack.c.l.b16 %v792
      %v795 = vpack.c.b16 %v794, %v794
      %796 = vrot.lane.b32.xlu0 %v795, 32
      %v797 = vpop.permute.xlu0 %796
      %799 = vst.msk [vmem:[%s302 + $0xc] sm:$0xf] %vm516, %v797
      %p800 = scmp.eq.s32.totalorder %s23, 1
      // Predicated region
      $region41: #{lstm_model_forward.2} parent=35 // pred_check
        %p801 = pneg %p800
      $region42: #{lstm_model_forward.2} parent=35 // pred_check_branch
        %803 = sbr.rel (%p801) target = $region44
      $region43: #{lstm_model_forward.2} parent=35 // pred_region
        %v804 = vld [vmem:[#allocation3] sm:$0xff]
        %805 = vst.msk [vmem:[%s307] sm:$0xff] %vm426, %v804
        %v806 = vld [vmem:[#allocation4] sm:$0xff]
        %807 = vst.msk [vmem:[%s311] sm:$0xff] %vm426, %v806
      $region44: #{lstm_model_forward.2} parent=35 // pred_fallthru
        _
      %s808 = smul.u32 4, %s23
      %p809 = scmp.lt.s32.totalorder %s22, 0
      %s810 = scalar_select %p809, %s22, 0
      %p811 = scmp.lt.s32.totalorder %s808, 7
      %s812 = scalar_select %p811, %s808, 7
      %s813 = smul.addr %s810, 8
      %s814 = sadd.s32 %s812, %s813
      %s815 = smul.addr %s814, 4
      %s816 = scalar_lea.vmem %s4, %s815
      %p817 = scmp.lt.s32.totalorder %s22, 0
      %s818 = scalar_select %p817, %s22, 0
      %s819 = smul.addr %s818, 8
      %s820 = scalar_lea.vmem %s5, %s819
      %p821 = scmp.lt.s32.totalorder %s22, 0
      %s822 = scalar_select %p821, %s22, 0
      %s823 = smul.addr %s822, 8
      %s824 = scalar_lea.vmem %s6, %s823
      // Predicated region
      $region45: #{lstm_model_forward.2} parent=35 // pred_check
        %p825 = pneg %p141
      $region46: #{lstm_model_forward.2} parent=35 // pred_check_branch
        %827 = sbr.rel (%p825) target = $region48
      $region47: #{lstm_model_forward.2} parent=35 // pred_region
        %s828 = smul.u32 4, %s23
      $region48: #{lstm_model_forward.2} parent=35 // pred_fallthru
        _
      // Predicated region
      $region49: #{lstm_model_forward.2} parent=35 // pred_check
        %p829 = pneg %p167
      $region50: #{lstm_model_forward.2} parent=35 // pred_check_branch
        %831 = sbr.rel (%p829) target = $region52
      $region51: #{lstm_model_forward.2} parent=35 // pred_region
        _
      $region52: #{lstm_model_forward.2} parent=35 // pred_fallthru
        _
      // Predicated region
      $region53: #{lstm_model_forward.2} parent=35 // pred_check
        %p832 = pneg %p193
      $region54: #{lstm_model_forward.2} parent=35 // pred_check_branch
        %834 = sbr.rel (%p832) target = $region56
      $region55: #{lstm_model_forward.2} parent=35 // pred_region
        _
      $region56: #{lstm_model_forward.2} parent=35 // pred_fallthru
        _
      // Predicated region
      $region57: #{lstm_model_forward.2} parent=35 // pred_check
        %p835 = pneg %p167
      $region58: #{lstm_model_forward.2} parent=35 // pred_check_branch
        %837 = sbr.rel (%p835) target = $region60
      $region59: #{lstm_model_forward.2} parent=35 // pred_region
        %p838 = scmp.lt.s32.totalorder %s22, 0
        %s839 = scalar_select %p838, %s22, 0
        %s840 = smul.addr %s839, 8
        %s841 = scalar_lea.vmem %s5, %s840
      $region60: #{lstm_model_forward.2} parent=35 // pred_fallthru
        _
      // Predicated region
      $region61: #{lstm_model_forward.2} parent=35 // pred_check
        %p842 = pneg %p193
      $region62: #{lstm_model_forward.2} parent=35 // pred_check_branch
        %844 = sbr.rel (%p842) target = $region64
      $region63: #{lstm_model_forward.2} parent=35 // pred_region
        %p845 = scmp.lt.s32.totalorder %s22, 0
        %s846 = scalar_select %p845, %s22, 0
        %s847 = smul.addr %s846, 8
        %s848 = scalar_lea.vmem %s6, %s847
      $region64: #{lstm_model_forward.2} parent=35 // pred_fallthru
        _
    $region36: #{lstm_model_forward.2} parent=5 // pred_fallthru
      _
    %p849 = scmp.le.s32.totalorder 2, %s13
    // Predicated region
    $region65: #{lstm_model_forward.2} parent=5 // pred_check
      %p850 = pneg %p849
    $region66: #{lstm_model_forward.2} parent=5 // pred_check_branch
      %852 = sbr.rel (%p850) target = $region68
    $region67: #{lstm_model_forward.2} parent=5 // pred_region
      %s853 = ssub.s32 %s13, 2
      // Predicated region
      $region69: #{lstm_model_forward.2} parent=67 // pred_check
        %p854 = pneg %p147
      $region70: #{lstm_model_forward.2} parent=67 // pred_check_branch
        %856 = sbr.rel (%p854) target = $region72
      $region71: #{lstm_model_forward.2} parent=67 // pred_region
        %s857 = smul.u32 4, %s25
        %p858 = scmp.lt.s32.totalorder %s24, 0
        %s859 = scalar_select %p858, %s24, 0
        %p860 = scmp.lt.s32.totalorder %s857, 7
        %s861 = scalar_select %p860, %s857, 7
        %s862 = smul.addr %s859, 8
        %s863 = sadd.s32 %s861, %s862
        %s864 = smul.addr %s863, 4
        %s865 = scalar_lea.vmem %s4, %s864
      $region72: #{lstm_model_forward.2} parent=67 // pred_fallthru
        _
    $region68: #{lstm_model_forward.2} parent=5 // pred_fallthru
      _
  $region6: #{lstm_model_forward.2} parent=0 // loop_footer
    %s17 = sadd.s32 1, %s13
  $region7: #{lstm_model_forward.2} parent=0 // loop_footer_branch
    %12 = sbr.rel target = $region3
  $region8: #{lstm_model_forward.2} parent=0 // loop_exit
    _

// kernel: lstm_model_forward.3
$region0: #{lstm_model_forward.3}
  #allocation0 [shape = 'u32[]', space=smem, size = 0x4, offset = 0x4, fixed_abs, tag = 'smem constant byte address 0x4 - core index']
  #allocation1 [shape = 'u32[144,128]{1,0:T(1,128)}', space=vmem, size = 0x12000, scoped, tag = 'internal scratch']
  #allocation2 [shape = 'f32[32,128]{1,0:T(8,128)}', space=vmem, size = 0x4000, scoped, tag = 'scratch operand']
  #allocation3 [shape = 'f32[8,32]{1,0:T(8,128)}', space=vmem, size = 0x1000, scoped, tag = 'scratch operand']
  #allocation4 [shape = 'f32[8,32]{1,0:T(8,128)}', space=vmem, size = 0x1000, scoped, tag = 'scratch operand']
  %s0 = inlined_call_operand.vmem [shape: bf16[1,64,32], index: 0, kind: input, shape index: {}]
  %s1 = inlined_call_operand.vmem [shape: bf16[32,128], index: 1, kind: input, shape index: {}]
  %s2 = inlined_call_operand.vmem [shape: bf16[32,128], index: 2, kind: input, shape index: {}]
  %s3 = inlined_call_operand.vmem [shape: f32[1,128], index: 3, kind: input, shape index: {}]
  %s4 = inlined_call_operand.vmem [shape: bf16[1,64,32], index: 4, kind: output, shape index: {0}]
  %s5 = inlined_call_operand.vmem [shape: f32[1,8,32], index: 5, kind: output, shape index: {1}]
  %s6 = inlined_call_operand.vmem [shape: f32[1,8,32], index: 6, kind: output, shape index: {2}]
  %7 = xla_tuple %s4, %s5, %s6
  %s8 = sld [smem:[#allocation0]]
  $region73: #{lstm_model_forward.3} parent=0
    _
  %s10 = ssub.s32 1, %s8
  %s11 = scalar_select 0, %s10, %s8
  loop: start=0, step=1, limit=4
  $region2: #{lstm_model_forward.3} parent=0 // loop_pre_header
    _
  $region3: #{lstm_model_forward.3} parent=0 // loop_header
    %s13 = sphi 0, %s17
    %p14 = scmp.ge.s32.totalorder %s13, 4
    %s20 = sphi 0, %s32
    %s21 = sphi 0, %s28
    %s22 = sphi 0, %s20
    %s23 = sphi 0, %s21
    %s24 = sphi 0, %s22
    %s25 = sphi 0, %s23
    %s37 = sphi 0, %s39
    %s40 = sphi 0, %s37
    %s41 = sphi 0, %s40
    %s57 = sphi 0, %s41
    %s61 = sphi 0, %s61
    %s63 = sphi 0, %s61
    %s64 = sphi 0, %s63
    %s78 = sphi 0, %s64
    %s82 = sphi 0, %s82
    %s84 = sphi 0, %s82
    %s85 = sphi 0, %s84
    %s99 = sphi 0, %s85
    %s103 = sphi 0, %s103
    %s105 = sphi 0, %s103
    %s106 = sphi 0, %s105
    %s120 = sphi 0, %s106
    %s128 = sphi 0, %s130
    %s131 = sphi 0, %s128
    %s132 = sphi 0, %s131
    %s148 = sphi 0, %s132
    %s154 = sphi 0, %s156
    %s157 = sphi 0, %s154
    %s158 = sphi 0, %s157
    %s174 = sphi 0, %s158
    %s180 = sphi 0, %s182
    %s183 = sphi 0, %s180
    %s184 = sphi 0, %s183
    %s200 = sphi 0, %s184
  $region4: #{lstm_model_forward.3} parent=0 // loop_header_branch
    %16 = sbr.rel (%p14) target = $region8
  $region5: #{lstm_model_forward.3} parent=0 // loop_body
    %s18 = ssub.s32 %s13, 1
    %s19 = ssub.s32 %s13, 2
    %s26 = sadd.s32 1, %s21
    %p27 = scmp.ge.s32.totalorder %s26, 2
    %s28 = scalar_select %p27, 0, %s26
    %s29 = sadd.s32 1, %s20
    %s30 = scalar_select %p27, %s29, %s20
    %p31 = scmp.ge.s32.totalorder %s30, 1
    %s32 = scalar_select %p31, 0, %s30
    %s33 = ssub.s32 %s20, %s32
    %s34 = ssub.s32 %s21, %s28
    %s35 = sor.u32 %s33, %s34
    %p36 = scmp.eq.s32.totalorder %s35, 0
    %s38 = sadd.s32 %s37, 1
    %s39 = scalar_select %p36, %s37, %s38
    %p42 = pneg %p36
    %p43 = scmp.eq.s32.totalorder %s13, 1
    %p44 = por %p42, %p43
    %p45 = scmp.ne.s32.totalorder %s37, %s40
    %p46 = scmp.eq.s32.totalorder %s13, 0
    %p47 = por %p45, %p46
    %p48 = scmp.ne.s32.totalorder %s37, %s40
    %p49 = scmp.eq.s32.totalorder %s18, 1
    %p50 = por %p48, %p49
    %p51 = scmp.ne.s32.totalorder %s40, %s41
    %p52 = scmp.eq.s32.totalorder %s18, 0
    %p53 = por %p51, %p52
    %p54 = scmp.ne.s32.totalorder %s40, %s41
    %p55 = scmp.eq.s32.totalorder %s19, 1
    %p56 = por %p54, %p55
    %p58 = scmp.ne.s32.totalorder %s41, %s57
    %p59 = scmp.eq.s32.totalorder %s19, 0
    %p60 = por %p58, %p59
    %s62 = sadd.s32 %s61, 1
    %p65 = scmp.eq.s32.totalorder %s13, 1
    %p66 = scmp.ne.s32.totalorder %s61, %s63
    %p67 = scmp.eq.s32.totalorder %s13, 0
    %p68 = por %p66, %p67
    %p69 = scmp.ne.s32.totalorder %s61, %s63
    %p70 = scmp.eq.s32.totalorder %s18, 1
    %p71 = por %p69, %p70
    %p72 = scmp.ne.s32.totalorder %s63, %s64
    %p73 = scmp.eq.s32.totalorder %s18, 0
    %p74 = por %p72, %p73
    %p75 = scmp.ne.s32.totalorder %s63, %s64
    %p76 = scmp.eq.s32.totalorder %s19, 1
    %p77 = por %p75, %p76
    %p79 = scmp.ne.s32.totalorder %s64, %s78
    %p80 = scmp.eq.s32.totalorder %s19, 0
    %p81 = por %p79, %p80
    %s83 = sadd.s32 %s82, 1
    %p86 = scmp.eq.s32.totalorder %s13, 1
    %p87 = scmp.ne.s32.totalorder %s82, %s84
    %p88 = scmp.eq.s32.totalorder %s13, 0
    %p89 = por %p87, %p88
    %p90 = scmp.ne.s32.totalorder %s82, %s84
    %p91 = scmp.eq.s32.totalorder %s18, 1
    %p92 = por %p90, %p91
    %p93 = scmp.ne.s32.totalorder %s84, %s85
    %p94 = scmp.eq.s32.totalorder %s18, 0
    %p95 = por %p93, %p94
    %p96 = scmp.ne.s32.totalorder %s84, %s85
    %p97 = scmp.eq.s32.totalorder %s19, 1
    %p98 = por %p96, %p97
    %p100 = scmp.ne.s32.totalorder %s85, %s99
    %p101 = scmp.eq.s32.totalorder %s19, 0
    %p102 = por %p100, %p101
    %s104 = sadd.s32 %s103, 1
    %p107 = scmp.eq.s32.totalorder %s13, 1
    %p108 = scmp.ne.s32.totalorder %s103, %s105
    %p109 = scmp.eq.s32.totalorder %s13, 0
    %p110 = por %p108, %p109
    %p111 = scmp.ne.s32.totalorder %s103, %s105
    %p112 = scmp.eq.s32.totalorder %s18, 1
    %p113 = por %p111, %p112
    %p114 = scmp.ne.s32.totalorder %s105, %s106
    %p115 = scmp.eq.s32.totalorder %s18, 0
    %p116 = por %p114, %p115
    %p117 = scmp.ne.s32.totalorder %s105, %s106
    %p118 = scmp.eq.s32.totalorder %s19, 1
    %p119 = por %p117, %p118
    %p121 = scmp.ne.s32.totalorder %s106, %s120
    %p122 = scmp.eq.s32.totalorder %s19, 0
    %p123 = por %p121, %p122
    %s124 = ssub.s32 %s20, %s32
    %s125 = ssub.s32 %s21, %s28
    %s126 = sor.u32 %s124, %s125
    %p127 = scmp.eq.s32.totalorder %s126, 0
    %s129 = sadd.s32 %s128, 1
    %s130 = scalar_select %p127, %s128, %s129
    %p133 = pneg %p127
    %p134 = scmp.eq.s32.totalorder %s13, 1
    %p135 = por %p133, %p134
    %p136 = scmp.ne.s32.totalorder %s128, %s131
    %p137 = scmp.eq.s32.totalorder %s13, 0
    %p138 = por %p136, %p137
    %p139 = scmp.ne.s32.totalorder %s128, %s131
    %p140 = scmp.eq.s32.totalorder %s18, 1
    %p141 = por %p139, %p140
    %p142 = scmp.ne.s32.totalorder %s131, %s132
    %p143 = scmp.eq.s32.totalorder %s18, 0
    %p144 = por %p142, %p143
    %p145 = scmp.ne.s32.totalorder %s131, %s132
    %p146 = scmp.eq.s32.totalorder %s19, 1
    %p147 = por %p145, %p146
    %p149 = scmp.ne.s32.totalorder %s132, %s148
    %p150 = scmp.eq.s32.totalorder %s19, 0
    %p151 = por %p149, %p150
    %s152 = ssub.s32 %s20, %s32
    %p153 = scmp.eq.s32.totalorder %s152, 0
    %s155 = sadd.s32 %s154, 1
    %s156 = scalar_select %p153, %s154, %s155
    %p159 = pneg %p153
    %p160 = scmp.eq.s32.totalorder %s13, 1
    %p161 = por %p159, %p160
    %p162 = scmp.ne.s32.totalorder %s154, %s157
    %p163 = scmp.eq.s32.totalorder %s13, 0
    %p164 = por %p162, %p163
    %p165 = scmp.ne.s32.totalorder %s154, %s157
    %p166 = scmp.eq.s32.totalorder %s18, 1
    %p167 = por %p165, %p166
    %p168 = scmp.ne.s32.totalorder %s157, %s158
    %p169 = scmp.eq.s32.totalorder %s18, 0
    %p170 = por %p168, %p169
    %p171 = scmp.ne.s32.totalorder %s157, %s158
    %p172 = scmp.eq.s32.totalorder %s19, 1
    %p173 = por %p171, %p172
    %p175 = scmp.ne.s32.totalorder %s158, %s174
    %p176 = scmp.eq.s32.totalorder %s19, 0
    %p177 = por %p175, %p176
    %s178 = ssub.s32 %s20, %s32
    %p179 = scmp.eq.s32.totalorder %s178, 0
    %s181 = sadd.s32 %s180, 1
    %s182 = scalar_select %p179, %s180, %s181
    %p185 = pneg %p179
    %p186 = scmp.eq.s32.totalorder %s13, 1
    %p187 = por %p185, %p186
    %p188 = scmp.ne.s32.totalorder %s180, %s183
    %p189 = scmp.eq.s32.totalorder %s13, 0
    %p190 = por %p188, %p189
    %p191 = scmp.ne.s32.totalorder %s180, %s183
    %p192 = scmp.eq.s32.totalorder %s18, 1
    %p193 = por %p191, %p192
    %p194 = scmp.ne.s32.totalorder %s183, %s184
    %p195 = scmp.eq.s32.totalorder %s18, 0
    %p196 = por %p194, %p195
    %p197 = scmp.ne.s32.totalorder %s183, %s184
    %p198 = scmp.eq.s32.totalorder %s19, 1
    %p199 = por %p197, %p198
    %p201 = scmp.ne.s32.totalorder %s184, %s200
    %p202 = scmp.eq.s32.totalorder %s19, 0
    %p203 = por %p201, %p202
    %p204 = scmp.le.s32.totalorder 1, %s13
    %p205 = scmp.lt.s32.totalorder %s13, 3
    %p206 = pnand %p204, %p205
    %p207 = pneg %p206
    // Predicated region
    $region9: #{lstm_model_forward.3} parent=5 // pred_check
      _
    $region10: #{lstm_model_forward.3} parent=5 // pred_check_branch
      %209 = sbr.rel (%p206) target = $region12
    $region11: #{lstm_model_forward.3} parent=5 // pred_region
      %s210 = ssub.s32 %s13, 1
      // Predicated region
      $region13: #{lstm_model_forward.3} parent=11 // pred_check
        %p211 = pneg %p74
      $region14: #{lstm_model_forward.3} parent=11 // pred_check_branch
        %213 = sbr.rel (%p211) target = $region16
      $region15: #{lstm_model_forward.3} parent=11 // pred_region
        _
      $region16: #{lstm_model_forward.3} parent=11 // pred_fallthru
        _
      // Predicated region
      $region17: #{lstm_model_forward.3} parent=11 // pred_check
        %p214 = pneg %p95
      $region18: #{lstm_model_forward.3} parent=11 // pred_check_branch
        %216 = sbr.rel (%p214) target = $region20
      $region19: #{lstm_model_forward.3} parent=11 // pred_region
        _
      $region20: #{lstm_model_forward.3} parent=11 // pred_fallthru
        _
      // Predicated region
      $region21: #{lstm_model_forward.3} parent=11 // pred_check
        %p217 = pneg %p116
      $region22: #{lstm_model_forward.3} parent=11 // pred_check_branch
        %219 = sbr.rel (%p217) target = $region24
      $region23: #{lstm_model_forward.3} parent=11 // pred_region
        _
      $region24: #{lstm_model_forward.3} parent=11 // pred_fallthru
        _
    $region12: #{lstm_model_forward.3} parent=5 // pred_fallthru
      _
    %p220 = scmp.lt.s32.totalorder %s13, 2
    // Predicated region
    $region25: #{lstm_model_forward.3} parent=5 // pred_check
      %p221 = pneg %p220
    $region26: #{lstm_model_forward.3} parent=5 // pred_check_branch
      %223 = sbr.rel (%p221) target = $region28
    $region27: #{lstm_model_forward.3} parent=5 // pred_region
      // Predicated region
      $region29: #{lstm_model_forward.3} parent=27 // pred_check
        %p224 = pneg %p47
      $region30: #{lstm_model_forward.3} parent=27 // pred_check_branch
        %226 = sbr.rel (%p224) target = $region32
      $region31: #{lstm_model_forward.3} parent=27 // pred_region
        %s227 = smul.u32 4, %s21
        %p228 = scmp.lt.s32.totalorder %s20, 0
        %s229 = scalar_select %p228, %s20, 0
        %p230 = scmp.lt.s32.totalorder %s227, 7
        %s231 = scalar_select %p230, %s227, 7
        %s232 = smul.addr %s229, 8
        %s233 = sadd.s32 %s231, %s232
        %s234 = smul.addr %s233, 4
        %s235 = scalar_lea.vmem %s0, %s234
        %s236 = smul.u32 4, %s21
      $region32: #{lstm_model_forward.3} parent=27 // pred_fallthru
        _
    $region28: #{lstm_model_forward.3} parent=5 // pred_fallthru
      _
    %p237 = scmp.le.s32.totalorder 1, %s13
    %p238 = scmp.lt.s32.totalorder %s13, 3
    %p239 = pnand %p237, %p238
    %p240 = pneg %p239
    // Predicated region
    $region33: #{lstm_model_forward.3} parent=5 // pred_check
      _
    $region34: #{lstm_model_forward.3} parent=5 // pred_check_branch
      %242 = sbr.rel (%p239) target = $region36
    $region35: #{lstm_model_forward.3} parent=5 // pred_region
      %s243 = ssub.s32 %s13, 1
      %s244 = smul.u32 4, %s23
      %p245 = scmp.lt.s32.totalorder %s22, 0
      %s246 = scalar_select %p245, %s22, 0
      %p247 = scmp.lt.s32.totalorder %s244, 7
      %s248 = scalar_select %p247, %s244, 7
      %s249 = smul.addr %s246, 8
      %s250 = sadd.s32 %s248, %s249
      %s251 = smul.addr %s250, 4
      %s252 = scalar_lea.vmem %s0, %s251
      %p253 = pneg %p53
      %p254 = pneg %p50
      %p255 = pneg %p74
      %p256 = pneg %p71
      %p257 = pneg %p95
      %p258 = pneg %p92
      %p259 = pneg %p116
      %p260 = pneg %p113
      %p261 = pneg %p144
      %p262 = pneg %p141
      %s263 = smul.u32 4, %s23
      %p264 = scmp.lt.s32.totalorder %s22, 0
      %s265 = scalar_select %p264, %s22, 0
      %p266 = scmp.lt.s32.totalorder %s263, 7
      %s267 = scalar_select %p266, %s263, 7
      %s268 = smul.addr %s265, 8
      %s269 = sadd.s32 %s267, %s268
      %s270 = smul.addr %s269, 4
      %s271 = scalar_lea.vmem %s4, %s270
      %p272 = pneg %p170
      %p273 = pneg %p167
      %p274 = scmp.lt.s32.totalorder %s22, 0
      %s275 = scalar_select %p274, %s22, 0
      %s276 = smul.addr %s275, 8
      %s277 = scalar_lea.vmem %s5, %s276
      %p278 = pneg %p196
      %p279 = pneg %p193
      %p280 = scmp.lt.s32.totalorder %s22, 0
      %s281 = scalar_select %p280, %s22, 0
      %s282 = smul.addr %s281, 8
      %s283 = scalar_lea.vmem %s6, %s282
      %s284 = smul.u32 4, %s23
      %p285 = scmp.lt.s32.totalorder %s22, 0
      %s286 = scalar_select %p285, %s22, 0
      %p287 = scmp.lt.s32.totalorder %s284, 7
      %s288 = scalar_select %p287, %s284, 7
      %s289 = smul.addr %s286, 8
      %s290 = sadd.s32 %s288, %s289
      %s291 = smul.addr %s290, 4
      %s292 = scalar_lea.vmem %s0, %s291
      %s293 = smul.u32 4, %s23
      %s294 = smul.u32 4, %s23
      %p295 = scmp.lt.s32.totalorder %s22, 0
      %s296 = scalar_select %p295, %s22, 0
      %p297 = scmp.lt.s32.totalorder %s294, 7
      %s298 = scalar_select %p297, %s294, 7
      %s299 = smul.addr %s296, 8
      %s300 = sadd.s32 %s298, %s299
      %s301 = smul.addr %s300, 4
      %s302 = scalar_lea.vmem %s4, %s301
      %s303 = smul.u32 4, %s23
      %p304 = scmp.lt.s32.totalorder %s22, 0
      %s305 = scalar_select %p304, %s22, 0
      %s306 = smul.addr %s305, 8
      %s307 = scalar_lea.vmem %s5, %s306
      %p308 = scmp.lt.s32.totalorder %s22, 0
      %s309 = scalar_select %p308, %s22, 0
      %s310 = smul.addr %s309, 8
      %s311 = scalar_lea.vmem %s6, %s310
      %p313 = scmp.eq.s32.totalorder %s23, 0
      // Predicated region
      $region37: #{lstm_model_forward.3} parent=35 // pred_check
        %p314 = pneg %p313
      $region38: #{lstm_model_forward.3} parent=35 // pred_check_branch
        %316 = sbr.rel (%p314) target = $region40
      $region39: #{lstm_model_forward.3} parent=35 // pred_region
        %vm317 = vcmask 261120
        %318 = vst.msk [vmem:[#allocation3] sm:$0xff] %vm317, 0.0
        %319 = vst.msk [vmem:[#allocation4] sm:$0xff] %vm317, 0.0
      $region40: #{lstm_model_forward.3} parent=35 // pred_fallthru
        _
      %v320 = vld [vmem:[%s292] sm:$0xf]
      %v321 = vld [vmem:[%s292 + $0x4] sm:$0xf]
      %v322 = vld [vmem:[%s292 + $0x8] sm:$0xf]
      %v323 = vld [vmem:[%s292 + $0xc] sm:$0xf]
      %v324 = vld [vmem:[%s1] sm:$0xf]
      %v325 = vld [vmem:[%s1 + $0x4] sm:$0xf]
      %v326 = vld [vmem:[%s1 + $0x8] sm:$0xf]
      %v327 = vld [vmem:[%s1 + $0xc] sm:$0xf]
      %v328 = vld [vmem:[%s3] sm:$0x1]
      %v330 = vlaneseq
      %v331 = vshrl.u32 %v330, 7
      %v332 = vsub.s32 0, %v331
      %v333 = vrot.slane %v328, %v332
      %v339 = vunpack.c.l.b16 %v320
      %v340 = vunpack.c.l.b16 %v321
      %v341 = vunpack.c.l.b16 %v322
      %v342 = vunpack.c.l.b16 %v323
      %v343 = vpack.c.b16 %v340, %v339
      %v344 = vpack.c.b16 %v342, %v341
      %v349 = vunpack.c.l.b16 %v324
      %v350 = vunpack.c.l.b16 %v325
      %v351 = vunpack.c.l.b16 %v326
      %v352 = vunpack.c.l.b16 %v327
      %v353 = vpack.c.b16 %v350, %v349
      %v354 = vpack.c.b16 %v352, %v351
      %vm357 = vcmask 261120
      %v359 = vsel %vm357, %v343, 0
      %v362 = vsel %vm357, %v344, 0
      %364 = vmatprep.subr.bf16.mxu0 0
      %365 = vmatpush1.bf16.msra.mxu0 %v353
      %366 = vmatprep.subr.bf16.mxu0 0
      %367 = vmatpush1.bf16.msra.mxu0 %v354
      %368 = vmatprep.subr.bf16.mxu0 0
      %369 = vmatpush1.bf16.msra.mxu0 0
      %370 = vmatprep.subr.bf16.mxu0 0
      %371 = vmatpush1.bf16.msra.mxu0 0
      %372 = vmatprep.subr.bf16.mxu0 0
      %373 = vmatpush1.bf16.msra.mxu0 0
      %374 = vmatprep.subr.bf16.mxu0 0
      %375 = vmatpush1.bf16.msra.mxu0 0
      %376 = vmatprep.subr.bf16.mxu0 0
      %377 = vmatpush1.bf16.msra.mxu0 0
      %378 = vmatprep.subr.bf16.mxu0 0
      %379 = vmatpush1.bf16.msra.mxu0 0
      %380 = vmatprep.subr.bf16.mxu0 0
      %381 = vmatpush1.bf16.msra.mxu0 0
      %382 = vmatprep.subr.bf16.mxu0 0
      %383 = vmatpush1.bf16.msra.mxu0 0
      %384 = vmatprep.subr.bf16.mxu0 0
      %385 = vmatpush1.bf16.msra.mxu0 0
      %386 = vmatprep.subr.bf16.mxu0 0
      %387 = vmatpush1.bf16.msra.mxu0 0
      %388 = vmatprep.subr.bf16.mxu0 0
      %389 = vmatpush1.bf16.msra.mxu0 0
      %390 = vmatprep.subr.bf16.mxu0 0
      %391 = vmatpush1.bf16.msra.mxu0 0
      %392 = vmatprep.subr.bf16.mxu0 0
      %393 = vmatpush1.bf16.msra.mxu0 0
      %394 = vmatprep.subr.bf16.mxu0 0
      %395 = vmatpush1.bf16.msra.mxu0 0
      %396 = vmatprep.mubr.bf16.mxu0 0
      %397 = vmatmul.mubr.bf16.gmra.mrb[0].mxu0 %v359
      %v398 = vpop.f32.mrb[0].mxu0
      %v399 = vadd.f32 %v333, %v398
      %v400 = vpop.f32.mrb[0].mxu0
      %v401 = vpop.f32.mrb[0].mxu0
      %v402 = vadd.f32 %v333, %v401
      %v403 = vpop.f32.mrb[0].mxu0
      %404 = vmatprep.mubr.bf16.mxu0 0
      %405 = vmatmul.mubr.bf16.gmra.mrb[0].mxu0 %v362
      %v406 = vpop.f32.mrb[0].mxu0
      %v407 = vadd.f32 %v333, %v406
      %v408 = vpop.f32.mrb[0].mxu0
      %v409 = vpop.f32.mrb[0].mxu0
      %v410 = vadd.f32 %v333, %v409
      %v411 = vpop.f32.mrb[0].mxu0
      %412 = vdwg.mxu0
      %413 = vst [vmem:[#allocation2] sm:$0xff] %v399
      %414 = vst [vmem:[#allocation2 + $0x8] sm:$0xff] %v402
      %415 = vst [vmem:[#allocation2 + $0x10] sm:$0xff] %v407
      %416 = vst [vmem:[#allocation2 + $0x18] sm:$0xff] %v410
      %v417 = vld [vmem:[%s2] sm:$0xf]
      %v418 = vld [vmem:[%s2 + $0x4] sm:$0xf]
      %v419 = vld [vmem:[%s2 + $0x8] sm:$0xf]
      %v420 = vld [vmem:[%s2 + $0xc] sm:$0xf]
      %v421 = vld [vmem:[#allocation3] sm:$0xff]
      %v422 = vld [vmem:[#allocation4] sm:$0xff]
      %v423 = vld [vmem:[#allocation2] sm:$0xff]
      %v424 = vpack.c.bf16 %v421, %v421
      %v429 = vunpack.c.l.b16 %v417
      %v430 = vunpack.c.l.b16 %v418
      %v431 = vunpack.c.l.b16 %v419
      %v432 = vunpack.c.l.b16 %v420
      %v433 = vpack.c.b16 %v430, %v429
      %v434 = vpack.c.b16 %v432, %v431
      %v438 = vsel %vm357, %v424, 0
      %440 = vmatprep.subr.bf16.mxu0 0
      %441 = vmatpush1.bf16.msra.mxu0 %v433
      %442 = vmatprep.subr.bf16.mxu0 0
      %443 = vmatpush1.bf16.msra.mxu0 %v434
      %444 = vmatprep.subr.bf16.mxu0 0
      %445 = vmatpush1.bf16.msra.mxu0 0
      %446 = vmatprep.subr.bf16.mxu0 0
      %447 = vmatpush1.bf16.msra.mxu0 0
      %448 = vmatprep.subr.bf16.mxu0 0
      %449 = vmatpush1.bf16.msra.mxu0 0
      %450 = vmatprep.subr.bf16.mxu0 0
      %451 = vmatpush1.bf16.msra.mxu0 0
      %452 = vmatprep.subr.bf16.mxu0 0
      %453 = vmatpush1.bf16.msra.mxu0 0
      %454 = vmatprep.subr.bf16.mxu0 0
      %455 = vmatpush1.bf16.msra.mxu0 0
      %456 = vmatprep.subr.bf16.mxu0 0
      %457 = vmatpush1.bf16.msra.mxu0 0
      %458 = vmatprep.subr.bf16.mxu0 0
      %459 = vmatpush1.bf16.msra.mxu0 0
      %460 = vmatprep.subr.bf16.mxu0 0
      %461 = vmatpush1.bf16.msra.mxu0 0
      %462 = vmatprep.subr.bf16.mxu0 0
      %463 = vmatpush1.bf16.msra.mxu0 0
      %464 = vmatprep.subr.bf16.mxu0 0
      %465 = vmatpush1.bf16.msra.mxu0 0
      %466 = vmatprep.subr.bf16.mxu0 0
      %467 = vmatpush1.bf16.msra.mxu0 0
      %468 = vmatprep.subr.bf16.mxu0 0
      %469 = vmatpush1.bf16.msra.mxu0 0
      %470 = vmatprep.subr.bf16.mxu0 0
      %471 = vmatpush1.bf16.msra.mxu0 0
      %472 = vmatprep.mubr.bf16.mxu0 0
      %473 = vmatmul.mubr.bf16.gmra.mrb[0].mxu0 %v438
      %v474 = vpop.f32.mrb[0].mxu0
      %v475 = vadd.f32 0.0, %v474
      %v476 = vpop.f32.mrb[0].mxu0
      %v477 = vpop.f32.mrb[0].mxu0
      %v478 = vpop.f32.mrb[0].mxu0
      %479 = vdwg.mxu0
      %v480 = vadd.f32 %v423, %v475
      %v481 = vxor.u32 %v480, 2147483648
      %v482 = vmul.f32 %v481, 1.442695
      %v483 = vpow.pop %v482
      %v484 = vadd.f32 %v483, 1.0
      %v485 = vrcp.pop %v484
      %v486 = vmul.f32 1.0, %v485
      %v487 = vtanh.pop %v480
      %489 = vrot.lane.b32.xlu0 %v422, 32
      %v490 = vpop.permute.xlu0 %489
      %v492 = vmul.f32 %v486, %v490
      %494 = vrot.lane.b32.xlu0 %v487, 64
      %v495 = vpop.permute.xlu0 %494
      %v497 = vmul.f32 %v486, %v495
      %499 = vrot.lane.b32.xlu0 %v497, 32
      %v500 = vpop.permute.xlu0 %499
      %v502 = vadd.f32 %v492, %v500
      %v503 = vtanh.pop %v502
      %505 = vrot.lane.b32.xlu0 %v503, 64
      %v506 = vpop.permute.xlu0 %505
      %v508 = vmul.f32 %v486, %v506
      %510 = vrot.lane.b32.xlu0 %v508, 32
      %v511 = vpop.permute.xlu0 %510
      %513 = vst.msk [vmem:[#allocation3] sm:$0xff] %vm357, %v511
      %515 = vrot.lane.b32.xlu0 %v502, 96
      %v516 = vpop.permute.xlu0 %515
      %518 = vst.msk [vmem:[#allocation4] sm:$0xff] %vm357, %v516
      %v519 = vpack.c.bf16 %v508, %v508
      %v521 = vunpack.c.l.b16 %v519
      %v522 = vpack.c.b16 %v521, %v521
      %523 = vrot.lane.b32.xlu0 %v522, 32
      %v524 = vpop.permute.xlu0 %523
      %vm526 = vcmask 257024
      %527 = vst.msk [vmem:[%s302] sm:$0xf] %vm526, %v524
      %v528 = vld [vmem:[#allocation3] sm:$0xff]
      %v529 = vld [vmem:[#allocation4] sm:$0xff]
      %v530 = vld [vmem:[#allocation2 + $0x8] sm:$0xff]
      %v531 = vpack.c.bf16 %v528, %v528
      %v533 = vsel %vm357, %v531, 0
      %535 = vmatprep.subr.bf16.mxu0 0
      %536 = vmatpush1.bf16.msra.mxu0 %v433
      %537 = vmatprep.subr.bf16.mxu0 0
      %538 = vmatpush1.bf16.msra.mxu0 %v434
      %539 = vmatprep.subr.bf16.mxu0 0
      %540 = vmatpush1.bf16.msra.mxu0 0
      %541 = vmatprep.subr.bf16.mxu0 0
      %542 = vmatpush1.bf16.msra.mxu0 0
      %543 = vmatprep.subr.bf16.mxu0 0
      %544 = vmatpush1.bf16.msra.mxu0 0
      %545 = vmatprep.subr.bf16.mxu0 0
      %546 = vmatpush1.bf16.msra.mxu0 0
      %547 = vmatprep.subr.bf16.mxu0 0
      %548 = vmatpush1.bf16.msra.mxu0 0
      %549 = vmatprep.subr.bf16.mxu0 0
      %550 = vmatpush1.bf16.msra.mxu0 0
      %551 = vmatprep.subr.bf16.mxu0 0
      %552 = vmatpush1.bf16.msra.mxu0 0
      %553 = vmatprep.subr.bf16.mxu0 0
      %554 = vmatpush1.bf16.msra.mxu0 0
      %555 = vmatprep.subr.bf16.mxu0 0
      %556 = vmatpush1.bf16.msra.mxu0 0
      %557 = vmatprep.subr.bf16.mxu0 0
      %558 = vmatpush1.bf16.msra.mxu0 0
      %559 = vmatprep.subr.bf16.mxu0 0
      %560 = vmatpush1.bf16.msra.mxu0 0
      %561 = vmatprep.subr.bf16.mxu0 0
      %562 = vmatpush1.bf16.msra.mxu0 0
      %563 = vmatprep.subr.bf16.mxu0 0
      %564 = vmatpush1.bf16.msra.mxu0 0
      %565 = vmatprep.subr.bf16.mxu0 0
      %566 = vmatpush1.bf16.msra.mxu0 0
      %567 = vmatprep.mubr.bf16.mxu0 0
      %568 = vmatmul.mubr.bf16.gmra.mrb[0].mxu0 %v533
      %v569 = vpop.f32.mrb[0].mxu0
      %v570 = vadd.f32 0.0, %v569
      %v571 = vpop.f32.mrb[0].mxu0
      %v572 = vpop.f32.mrb[0].mxu0
      %v573 = vpop.f32.mrb[0].mxu0
      %574 = vdwg.mxu0
      %v575 = vadd.f32 %v530, %v570
      %v576 = vxor.u32 %v575, 2147483648
      %v577 = vmul.f32 %v576, 1.442695
      %v578 = vpow.pop %v577
      %v579 = vadd.f32 %v578, 1.0
      %v580 = vrcp.pop %v579
      %v581 = vmul.f32 1.0, %v580
      %v582 = vtanh.pop %v575
      %584 = vrot.lane.b32.xlu0 %v529, 32
      %v585 = vpop.permute.xlu0 %584
      %v587 = vmul.f32 %v581, %v585
      %589 = vrot.lane.b32.xlu0 %v582, 64
      %v590 = vpop.permute.xlu0 %589
      %v592 = vmul.f32 %v581, %v590
      %594 = vrot.lane.b32.xlu0 %v592, 32
      %v595 = vpop.permute.xlu0 %594
      %v597 = vadd.f32 %v587, %v595
      %v598 = vtanh.pop %v597
      %600 = vrot.lane.b32.xlu0 %v598, 64
      %v601 = vpop.permute.xlu0 %600
      %v603 = vmul.f32 %v581, %v601
      %605 = vrot.lane.b32.xlu0 %v603, 32
      %v606 = vpop.permute.xlu0 %605
      %608 = vst.msk [vmem:[#allocation3] sm:$0xff] %vm357, %v606
      %610 = vrot.lane.b32.xlu0 %v597, 96
      %v611 = vpop.permute.xlu0 %610
      %613 = vst.msk [vmem:[#allocation4] sm:$0xff] %vm357, %v611
      %v614 = vpack.c.bf16 %v603, %v603
      %v616 = vunpack.c.l.b16 %v614
      %v617 = vpack.c.b16 %v616, %v616
      %618 = vrot.lane.b32.xlu0 %v617, 32
      %v619 = vpop.permute.xlu0 %618
      %621 = vst.msk [vmem:[%s302 + $0x4] sm:$0xf] %vm526, %v619
      %v622 = vld [vmem:[#allocation3] sm:$0xff]
      %v623 = vld [vmem:[#allocation4] sm:$0xff]
      %v624 = vld [vmem:[#allocation2 + $0x10] sm:$0xff]
      %v625 = vpack.c.bf16 %v622, %v622
      %v627 = vsel %vm357, %v625, 0
      %629 = vmatprep.subr.bf16.mxu0 0
      %630 = vmatpush1.bf16.msra.mxu0 %v433
      %631 = vmatprep.subr.bf16.mxu0 0
      %632 = vmatpush1.bf16.msra.mxu0 %v434
      %633 = vmatprep.subr.bf16.mxu0 0
      %634 = vmatpush1.bf16.msra.mxu0 0
      %635 = vmatprep.subr.bf16.mxu0 0
      %636 = vmatpush1.bf16.msra.mxu0 0
      %637 = vmatprep.subr.bf16.mxu0 0
      %638 = vmatpush1.bf16.msra.mxu0 0
      %639 = vmatprep.subr.bf16.mxu0 0
      %640 = vmatpush1.bf16.msra.mxu0 0
      %641 = vmatprep.subr.bf16.mxu0 0
      %642 = vmatpush1.bf16.msra.mxu0 0
      %643 = vmatprep.subr.bf16.mxu0 0
      %644 = vmatpush1.bf16.msra.mxu0 0
      %645 = vmatprep.subr.bf16.mxu0 0
      %646 = vmatpush1.bf16.msra.mxu0 0
      %647 = vmatprep.subr.bf16.mxu0 0
      %648 = vmatpush1.bf16.msra.mxu0 0
      %649 = vmatprep.subr.bf16.mxu0 0
      %650 = vmatpush1.bf16.msra.mxu0 0
      %651 = vmatprep.subr.bf16.mxu0 0
      %652 = vmatpush1.bf16.msra.mxu0 0
      %653 = vmatprep.subr.bf16.mxu0 0
      %654 = vmatpush1.bf16.msra.mxu0 0
      %655 = vmatprep.subr.bf16.mxu0 0
      %656 = vmatpush1.bf16.msra.mxu0 0
      %657 = vmatprep.subr.bf16.mxu0 0
      %658 = vmatpush1.bf16.msra.mxu0 0
      %659 = vmatprep.subr.bf16.mxu0 0
      %660 = vmatpush1.bf16.msra.mxu0 0
      %661 = vmatprep.mubr.bf16.mxu0 0
      %662 = vmatmul.mubr.bf16.gmra.mrb[0].mxu0 %v627
      %v663 = vpop.f32.mrb[0].mxu0
      %v664 = vadd.f32 0.0, %v663
      %v665 = vpop.f32.mrb[0].mxu0
      %v666 = vpop.f32.mrb[0].mxu0
      %v667 = vpop.f32.mrb[0].mxu0
      %668 = vdwg.mxu0
      %v669 = vadd.f32 %v624, %v664
      %v670 = vxor.u32 %v669, 2147483648
      %v671 = vmul.f32 %v670, 1.442695
      %v672 = vpow.pop %v671
      %v673 = vadd.f32 %v672, 1.0
      %v674 = vrcp.pop %v673
      %v675 = vmul.f32 1.0, %v674
      %v676 = vtanh.pop %v669
      %678 = vrot.lane.b32.xlu0 %v623, 32
      %v679 = vpop.permute.xlu0 %678
      %v681 = vmul.f32 %v675, %v679
      %683 = vrot.lane.b32.xlu0 %v676, 64
      %v684 = vpop.permute.xlu0 %683
      %v686 = vmul.f32 %v675, %v684
      %688 = vrot.lane.b32.xlu0 %v686, 32
      %v689 = vpop.permute.xlu0 %688
      %v691 = vadd.f32 %v681, %v689
      %v692 = vtanh.pop %v691
      %694 = vrot.lane.b32.xlu0 %v692, 64
      %v695 = vpop.permute.xlu0 %694
      %v697 = vmul.f32 %v675, %v695
      %699 = vrot.lane.b32.xlu0 %v697, 32
      %v700 = vpop.permute.xlu0 %699
      %702 = vst.msk [vmem:[#allocation3] sm:$0xff] %vm357, %v700
      %704 = vrot.lane.b32.xlu0 %v691, 96
      %v705 = vpop.permute.xlu0 %704
      %707 = vst.msk [vmem:[#allocation4] sm:$0xff] %vm357, %v705
      %v708 = vpack.c.bf16 %v697, %v697
      %v710 = vunpack.c.l.b16 %v708
      %v711 = vpack.c.b16 %v710, %v710
      %712 = vrot.lane.b32.xlu0 %v711, 32
      %v713 = vpop.permute.xlu0 %712
      %715 = vst.msk [vmem:[%s302 + $0x8] sm:$0xf] %vm526, %v713
      %v716 = vld [vmem:[#allocation3] sm:$0xff]
      %v717 = vld [vmem:[#allocation4] sm:$0xff]
      %v718 = vld [vmem:[#allocation2 + $0x18] sm:$0xff]
      %v719 = vpack.c.bf16 %v716, %v716
      %v721 = vsel %vm357, %v719, 0
      %723 = vmatprep.subr.bf16.mxu0 0
      %724 = vmatpush1.bf16.msra.mxu0 %v433
      %725 = vmatprep.subr.bf16.mxu0 0
      %726 = vmatpush1.bf16.msra.mxu0 %v434
      %727 = vmatprep.subr.bf16.mxu0 0
      %728 = vmatpush1.bf16.msra.mxu0 0
      %729 = vmatprep.subr.bf16.mxu0 0
      %730 = vmatpush1.bf16.msra.mxu0 0
      %731 = vmatprep.subr.bf16.mxu0 0
      %732 = vmatpush1.bf16.msra.mxu0 0
      %733 = vmatprep.subr.bf16.mxu0 0
      %734 = vmatpush1.bf16.msra.mxu0 0
      %735 = vmatprep.subr.bf16.mxu0 0
      %736 = vmatpush1.bf16.msra.mxu0 0
      %737 = vmatprep.subr.bf16.mxu0 0
      %738 = vmatpush1.bf16.msra.mxu0 0
      %739 = vmatprep.subr.bf16.mxu0 0
      %740 = vmatpush1.bf16.msra.mxu0 0
      %741 = vmatprep.subr.bf16.mxu0 0
      %742 = vmatpush1.bf16.msra.mxu0 0
      %743 = vmatprep.subr.bf16.mxu0 0
      %744 = vmatpush1.bf16.msra.mxu0 0
      %745 = vmatprep.subr.bf16.mxu0 0
      %746 = vmatpush1.bf16.msra.mxu0 0
      %747 = vmatprep.subr.bf16.mxu0 0
      %748 = vmatpush1.bf16.msra.mxu0 0
      %749 = vmatprep.subr.bf16.mxu0 0
      %750 = vmatpush1.bf16.msra.mxu0 0
      %751 = vmatprep.subr.bf16.mxu0 0
      %752 = vmatpush1.bf16.msra.mxu0 0
      %753 = vmatprep.subr.bf16.mxu0 0
      %754 = vmatpush1.bf16.msra.mxu0 0
      %755 = vmatprep.mubr.bf16.mxu0 0
      %756 = vmatmul.mubr.bf16.gmra.mrb[0].mxu0 %v721
      %v757 = vpop.f32.mrb[0].mxu0
      %v758 = vadd.f32 0.0, %v757
      %v759 = vpop.f32.mrb[0].mxu0
      %v760 = vpop.f32.mrb[0].mxu0
      %v761 = vpop.f32.mrb[0].mxu0
      %762 = vdwg.mxu0
      %v763 = vadd.f32 %v718, %v758
      %v764 = vxor.u32 %v763, 2147483648
      %v765 = vmul.f32 %v764, 1.442695
      %v766 = vpow.pop %v765
      %v767 = vadd.f32 %v766, 1.0
      %v768 = vrcp.pop %v767
      %v769 = vmul.f32 1.0, %v768
      %v770 = vtanh.pop %v763
      %772 = vrot.lane.b32.xlu0 %v717, 32
      %v773 = vpop.permute.xlu0 %772
      %v775 = vmul.f32 %v769, %v773
      %777 = vrot.lane.b32.xlu0 %v770, 64
      %v778 = vpop.permute.xlu0 %777
      %v780 = vmul.f32 %v769, %v778
      %782 = vrot.lane.b32.xlu0 %v780, 32
      %v783 = vpop.permute.xlu0 %782
      %v785 = vadd.f32 %v775, %v783
      %v786 = vtanh.pop %v785
      %788 = vrot.lane.b32.xlu0 %v786, 64
      %v789 = vpop.permute.xlu0 %788
      %v791 = vmul.f32 %v769, %v789
      %793 = vrot.lane.b32.xlu0 %v791, 32
      %v794 = vpop.permute.xlu0 %793
      %796 = vst.msk [vmem:[#allocation3] sm:$0xff] %vm357, %v794
      %798 = vrot.lane.b32.xlu0 %v785, 96
      %v799 = vpop.permute.xlu0 %798
      %801 = vst.msk [vmem:[#allocation4] sm:$0xff] %vm357, %v799
      %v802 = vpack.c.bf16 %v791, %v791
      %v804 = vunpack.c.l.b16 %v802
      %v805 = vpack.c.b16 %v804, %v804
      %806 = vrot.lane.b32.xlu0 %v805, 32
      %v807 = vpop.permute.xlu0 %806
      %809 = vst.msk [vmem:[%s302 + $0xc] sm:$0xf] %vm526, %v807
      %p810 = scmp.eq.s32.totalorder %s23, 1
      // Predicated region
      $region41: #{lstm_model_forward.3} parent=35 // pred_check
        %p811 = pneg %p810
      $region42: #{lstm_model_forward.3} parent=35 // pred_check_branch
        %813 = sbr.rel (%p811) target = $region44
      $region43: #{lstm_model_forward.3} parent=35 // pred_region
        %v814 = vld [vmem:[#allocation3] sm:$0xff]
        %815 = vst.msk [vmem:[%s307] sm:$0xff] %vm357, %v814
        %v816 = vld [vmem:[#allocation4] sm:$0xff]
        %817 = vst.msk [vmem:[%s311] sm:$0xff] %vm357, %v816
      $region44: #{lstm_model_forward.3} parent=35 // pred_fallthru
        _
      %s818 = smul.u32 4, %s23
      %p819 = scmp.lt.s32.totalorder %s22, 0
      %s820 = scalar_select %p819, %s22, 0
      %p821 = scmp.lt.s32.totalorder %s818, 7
      %s822 = scalar_select %p821, %s818, 7
      %s823 = smul.addr %s820, 8
      %s824 = sadd.s32 %s822, %s823
      %s825 = smul.addr %s824, 4
      %s826 = scalar_lea.vmem %s4, %s825
      %p827 = scmp.lt.s32.totalorder %s22, 0
      %s828 = scalar_select %p827, %s22, 0
      %s829 = smul.addr %s828, 8
      %s830 = scalar_lea.vmem %s5, %s829
      %p831 = scmp.lt.s32.totalorder %s22, 0
      %s832 = scalar_select %p831, %s22, 0
      %s833 = smul.addr %s832, 8
      %s834 = scalar_lea.vmem %s6, %s833
      // Predicated region
      $region45: #{lstm_model_forward.3} parent=35 // pred_check
        %p835 = pneg %p141
      $region46: #{lstm_model_forward.3} parent=35 // pred_check_branch
        %837 = sbr.rel (%p835) target = $region48
      $region47: #{lstm_model_forward.3} parent=35 // pred_region
        %s838 = smul.u32 4, %s23
      $region48: #{lstm_model_forward.3} parent=35 // pred_fallthru
        _
      // Predicated region
      $region49: #{lstm_model_forward.3} parent=35 // pred_check
        %p839 = pneg %p167
      $region50: #{lstm_model_forward.3} parent=35 // pred_check_branch
        %841 = sbr.rel (%p839) target = $region52
      $region51: #{lstm_model_forward.3} parent=35 // pred_region
        _
      $region52: #{lstm_model_forward.3} parent=35 // pred_fallthru
        _
      // Predicated region
      $region53: #{lstm_model_forward.3} parent=35 // pred_check
        %p842 = pneg %p193
      $region54: #{lstm_model_forward.3} parent=35 // pred_check_branch
        %844 = sbr.rel (%p842) target = $region56
      $region55: #{lstm_model_forward.3} parent=35 // pred_region
        _
      $region56: #{lstm_model_forward.3} parent=35 // pred_fallthru
        _
      // Predicated region
      $region57: #{lstm_model_forward.3} parent=35 // pred_check
        %p845 = pneg %p167
      $region58: #{lstm_model_forward.3} parent=35 // pred_check_branch
        %847 = sbr.rel (%p845) target = $region60
      $region59: #{lstm_model_forward.3} parent=35 // pred_region
        %p848 = scmp.lt.s32.totalorder %s22, 0
        %s849 = scalar_select %p848, %s22, 0
        %s850 = smul.addr %s849, 8
        %s851 = scalar_lea.vmem %s5, %s850
      $region60: #{lstm_model_forward.3} parent=35 // pred_fallthru
        _
      // Predicated region
      $region61: #{lstm_model_forward.3} parent=35 // pred_check
        %p852 = pneg %p193
      $region62: #{lstm_model_forward.3} parent=35 // pred_check_branch
        %854 = sbr.rel (%p852) target = $region64
      $region63: #{lstm_model_forward.3} parent=35 // pred_region
        %p855 = scmp.lt.s32.totalorder %s22, 0
        %s856 = scalar_select %p855, %s22, 0
        %s857 = smul.addr %s856, 8
        %s858 = scalar_lea.vmem %s6, %s857
      $region64: #{lstm_model_forward.3} parent=35 // pred_fallthru
        _
    $region36: #{lstm_model_forward.3} parent=5 // pred_fallthru
      _
    %p859 = scmp.le.s32.totalorder 2, %s13
    // Predicated region
    $region65: #{lstm_model_forward.3} parent=5 // pred_check
      %p860 = pneg %p859
    $region66: #{lstm_model_forward.3} parent=5 // pred_check_branch
      %862 = sbr.rel (%p860) target = $region68
    $region67: #{lstm_model_forward.3} parent=5 // pred_region
      %s863 = ssub.s32 %s13, 2
      // Predicated region
      $region69: #{lstm_model_forward.3} parent=67 // pred_check
        %p864 = pneg %p147
      $region70: #{lstm_model_forward.3} parent=67 // pred_check_branch
        %866 = sbr.rel (%p864) target = $region72
      $region71: #{lstm_model_forward.3} parent=67 // pred_region
        %s867 = smul.u32 4, %s25
        %p868 = scmp.lt.s32.totalorder %s24, 0
        %s869 = scalar_select %p868, %s24, 0
        %p870 = scmp.lt.s32.totalorder %s867, 7
        %s871 = scalar_select %p870, %s867, 7
        %s872 = smul.addr %s869, 8
        %s873 = sadd.s32 %s871, %s872
        %s874 = smul.addr %s873, 4
        %s875 = scalar_lea.vmem %s4, %s874
      $region72: #{lstm_model_forward.3} parent=67 // pred_fallthru
        _
    $region68: #{lstm_model_forward.3} parent=5 // pred_fallthru
      _
  $region6: #{lstm_model_forward.3} parent=0 // loop_footer
    %s17 = sadd.s32 1, %s13
  $region7: #{lstm_model_forward.3} parent=0 // loop_footer_branch
    %12 = sbr.rel target = $region3
  $region8: #{lstm_model_forward.3} parent=0 // loop_exit
    _

</llo_original>
